<compile_context>
chip_gen: v6e
topology: v6e:2x2x1
jax: 0.10.0
libtpu: 0.0.40
codegen_flags: <defaults>
</compile_context>

<pallas_src>
import functools

import jax
import jax.numpy as jnp
from jax.experimental import pallas as pl
from jax.experimental.pallas import tpu as pltpu


# ---------------------------------------------------------------------------
# generic batched linear kernel (bf16 MXU operands, f32 accumulation)
# ---------------------------------------------------------------------------
def _linear_kernel(x_ref, w_ref, b_ref, o_ref, *, act):
    x = x_ref[...].astype(jnp.bfloat16)
    y = jnp.dot(x, w_ref[...], preferred_element_type=jnp.float32) + b_ref[...]
    if act == "relu":
        y = jnp.maximum(y, 0.0)
    elif act == "tanh":
        y = jnp.tanh(y)
    o_ref[...] = y.astype(o_ref.dtype)


def linear(x, w, b, act="none"):
    M, K = x.shape
    N = w.shape[1]
    return pl.pallas_call(
        functools.partial(_linear_kernel, act=act),
        out_shape=jax.ShapeDtypeStruct((M, N), jnp.float32),
        grid=(1,),
        in_specs=[
            pl.BlockSpec((M, K), lambda i: (0, 0)),
            pl.BlockSpec((K, N), lambda i: (0, 0)),
            pl.BlockSpec((1, N), lambda i: (0, 0)),
        ],
        out_specs=pl.BlockSpec((M, N), lambda i: (0, 0)),
    )(x, w.astype(jnp.bfloat16), b.reshape(1, N))


# ---------------------------------------------------------------------------
# fused prenet (2x linear+ReLU) + attention-LSTM x-projection, batched over
# all decoder steps (teacher forcing: inputs are fully known up front)
# ---------------------------------------------------------------------------
def _prenet_proj_kernel(x_ref, w1_ref, b1_ref, w2_ref, b2_ref, wa_ref, o_ref):
    p1 = jnp.maximum(
        jnp.dot(x_ref[...].astype(jnp.bfloat16), w1_ref[...],
                preferred_element_type=jnp.float32) + b1_ref[...], 0.0)
    p2 = jnp.maximum(
        jnp.dot(p1.astype(jnp.bfloat16), w2_ref[...],
                preferred_element_type=jnp.float32) + b2_ref[...], 0.0)
    o_ref[...] = jnp.dot(p2.astype(jnp.bfloat16), wa_ref[...],
                         preferred_element_type=jnp.float32)


def prenet_proj(x, w1, b1, w2, b2, wa):
    M, Kin = x.shape
    P = w1.shape[1]
    N = wa.shape[1]
    return pl.pallas_call(
        _prenet_proj_kernel,
        out_shape=jax.ShapeDtypeStruct((M, N), jnp.float32),
        grid=(1,),
        in_specs=[
            pl.BlockSpec((M, Kin), lambda i: (0, 0)),
            pl.BlockSpec((Kin, P), lambda i: (0, 0)),
            pl.BlockSpec((1, P), lambda i: (0, 0)),
            pl.BlockSpec((P, P), lambda i: (0, 0)),
            pl.BlockSpec((1, P), lambda i: (0, 0)),
            pl.BlockSpec((P, N), lambda i: (0, 0)),
        ],
        out_specs=pl.BlockSpec((M, N), lambda i: (0, 0)),
    )(x, w1.astype(jnp.bfloat16), b1.reshape(1, P),
      w2.astype(jnp.bfloat16), b2.reshape(1, P), wa.astype(jnp.bfloat16))


# ---------------------------------------------------------------------------
# fused 3-layer (conv1d k=5 "same" + folded BN + activation) stack.
# One pallas_call per stack; intermediates stay in VMEM scratch.
# Each conv is a single im2col contraction (one MXU matmul per layer).
# ---------------------------------------------------------------------------
def _conv_stack_kernel(x_ref, w0_ref, s0_ref, h0_ref, w1_ref, s1_ref, h1_ref,
                       w2_ref, s2_ref, h2_ref, o_ref, buf1, buf2,
                       *, K, T, acts, residual):
    pad = K // 2

    def layer(xp, w_ref, s_ref, h_ref, act):
        # im2col: K shifted slices concatenated along lanes -> one contraction
        slab = jnp.concatenate([xp[k:k + T, :] for k in range(K)],
                               axis=-1).astype(jnp.bfloat16)
        y = jnp.dot(slab, w_ref[...], preferred_element_type=jnp.float32)
        y = y * s_ref[...] + h_ref[...]            # folded eval-mode BatchNorm
        if act == "relu":
            y = jnp.maximum(y, 0.0)
        elif act == "tanh":
            y = jnp.tanh(y)
        return y                                    # [T, Cout]

    xin = x_ref[0]                                  # [Tp, C0] (pre-padded in T)

    y0 = layer(xin, w0_ref, s0_ref, h0_ref, acts[0])
    buf1[...] = jnp.zeros_like(buf1)
    buf1[pad:pad + T, :] = y0

    y1 = layer(buf1[...], w1_ref, s1_ref, h1_ref, acts[1])
    buf2[...] = jnp.zeros_like(buf2)
    buf2[pad:pad + T, :] = y1

    y2 = layer(buf2[...], w2_ref, s2_ref, h2_ref, acts[2])
    if residual:
        y2 = y2 + xin[pad:pad + T, :]               # fused residual add
    o_ref[0] = y2.astype(o_ref.dtype)


def conv_stack(x, weights, scales, shifts, acts, residual=False):
    # x: [B, T, C0]; weights[i]: [K, Cin_i, Cout_i]
    B, T, C0 = x.shape
    K = weights[0].shape[0]
    pad = K // 2
    Tp = T + 2 * pad
    xp = jnp.pad(x, ((0, 0), (pad, pad), (0, 0)))
    C1, C2, C3 = (w.shape[2] for w in weights)

    w_flat = [w.reshape(K * w.shape[1], w.shape[2]).astype(jnp.bfloat16)
              for w in weights]

    in_specs = [pl.BlockSpec((1, Tp, C0), lambda b: (b, 0, 0))]
    args = [xp]
    for wf, s, h in zip(w_flat, scales, shifts):
        in_specs += [
            pl.BlockSpec(wf.shape, lambda b: (0, 0)),
            pl.BlockSpec((1, s.shape[0]), lambda b: (0, 0)),
            pl.BlockSpec((1, h.shape[0]), lambda b: (0, 0)),
        ]
        args += [wf, s.reshape(1, -1), h.reshape(1, -1)]

    return pl.pallas_call(
        functools.partial(_conv_stack_kernel, K=K, T=T, acts=acts,
                          residual=residual),
        out_shape=jax.ShapeDtypeStruct((B, T, C3), jnp.float32),
        grid=(B,),
        in_specs=in_specs,
        out_specs=pl.BlockSpec((1, T, C3), lambda b: (b, 0, 0)),
        scratch_shapes=[pltpu.VMEM((Tp, C1), jnp.float32),
                        pltpu.VMEM((Tp, C2), jnp.float32)],
        compiler_params=pltpu.CompilerParams(dimension_semantics=("parallel",)),
    )(*args)


# ---------------------------------------------------------------------------
# bidirectional LSTM recurrence.  x-projection (x@Wx + b) is hoisted outside;
# the kernel only does h@Wh per step.  Grid = (direction, time): the direction
# axis is "parallel" so the two directions map to the two TCs on v7x.
# ---------------------------------------------------------------------------
def _bilstm_kernel(gx_ref, wh_ref, y_ref, h_ref, c_ref):
    @pl.when(pl.program_id(1) == 0)
    def _():
        h_ref[...] = jnp.zeros_like(h_ref)
        c_ref[...] = jnp.zeros_like(c_ref)

    H = h_ref.shape[-1]
    gates = gx_ref[0, 0] + jnp.dot(h_ref[...].astype(jnp.bfloat16), wh_ref[0],
                                   preferred_element_type=jnp.float32)
    i = jax.nn.sigmoid(gates[:, 0:H])
    f = jax.nn.sigmoid(gates[:, H:2 * H])
    g = jnp.tanh(gates[:, 2 * H:3 * H])
    o = jax.nn.sigmoid(gates[:, 3 * H:4 * H])
    c = f * c_ref[...] + i * g
    h = o * jnp.tanh(c)
    c_ref[...] = c
    h_ref[...] = h
    y_ref[0, 0] = h


def bilstm(x_btc, p):
    B, T, E = x_btc.shape
    H = p["lstm_f_wh"].shape[0]
    x_tbc = jnp.transpose(x_btc, (1, 0, 2))                        # [T, B, E]

    # hoisted x-projection: both directions in one [T*B, E] @ [E, 8H] matmul
    wx_cat = jnp.concatenate([p["lstm_f_wx"], p["lstm_b_wx"]], axis=1)
    b_cat = jnp.concatenate([p["lstm_f_b"], p["lstm_b_b"]], axis=0)
    gx = linear(x_tbc.reshape(T * B, E), wx_cat, b_cat).reshape(T, B, 8 * H)
    gx_f = gx[..., :4 * H]
    gx_b = gx[..., 4 * H:][::-1]                                   # reversed time
    gx_stack = jnp.stack([gx_f, gx_b], axis=0)                     # [2, T, B, 4H]
    wh_stack = jnp.stack([p["lstm_f_wh"], p["lstm_b_wh"]],
                         axis=0).astype(jnp.bfloat16)              # [2, H, 4H]

    y = pl.pallas_call(
        _bilstm_kernel,
        out_shape=jax.ShapeDtypeStruct((2, T, B, H), jnp.float32),
        grid=(2, T),
        in_specs=[
            pl.BlockSpec((1, 1, B, 4 * H), lambda d, t: (d, t, 0, 0)),
            pl.BlockSpec((1, H, 4 * H), lambda d, t: (d, 0, 0)),
        ],
        out_specs=pl.BlockSpec((1, 1, B, H), lambda d, t: (d, t, 0, 0)),
        scratch_shapes=[pltpu.VMEM((B, H), jnp.float32),
                        pltpu.VMEM((B, H), jnp.float32)],
        compiler_params=pltpu.CompilerParams(
            dimension_semantics=("parallel", "arbitrary")),
    )(gx_stack, wh_stack)

    hf = y[0]
    hb = y[1][::-1]
    return jnp.transpose(jnp.concatenate([hf, hb], axis=-1), (1, 0, 2))  # [B,T,2H]


# ---------------------------------------------------------------------------
# attention decoder recurrence.  Prenet / x-projections / mel / stop are all
# hoisted outside; the per-step body is only the two LSTM cells + attention,
# and it emits lane-dense 128-wide dh / ctx streams.
# ---------------------------------------------------------------------------
def _cell(x_proj, h, c, wh_ref, b_ref):
    H = h.shape[-1]
    gates = (x_proj
             + jnp.dot(h.astype(jnp.bfloat16), wh_ref[...],
                       preferred_element_type=jnp.float32)
             + b_ref[...])
    i = jax.nn.sigmoid(gates[:, 0:H])
    f = jax.nn.sigmoid(gates[:, H:2 * H])
    g = jnp.tanh(gates[:, 2 * H:3 * H])
    o = jax.nn.sigmoid(gates[:, 3 * H:4 * H])
    c_new = f * c + i * g
    h_new = o * jnp.tanh(c_new)
    return h_new, c_new


def _decoder_kernel(xpre_ref, mem_ref, pmem_ref,
                    waxc_ref, wah_ref, ba_ref,
                    wq_ref, v_ref,
                    wdxh_ref, wdxc_ref, wdh_ref, bd_ref,
                    dh_out_ref, ctx_out_ref,
                    ah_ref, ac_ref, dh_ref, dc_ref, ctx_ref):
    @pl.when(pl.program_id(0) == 0)
    def _():
        ah_ref[...] = jnp.zeros_like(ah_ref)
        ac_ref[...] = jnp.zeros_like(ac_ref)
        dh_ref[...] = jnp.zeros_like(dh_ref)
        dc_ref[...] = jnp.zeros_like(dc_ref)
        ctx_ref[...] = jnp.zeros_like(ctx_ref)

    # attention LSTM cell; prenet + prenet-side x-projection already hoisted
    ctx = ctx_ref[...]
    xproj_a = xpre_ref[0] + jnp.dot(ctx.astype(jnp.bfloat16), waxc_ref[...],
                                    preferred_element_type=jnp.float32)
    ah, ac = _cell(xproj_a, ah_ref[...], ac_ref[...], wah_ref, ba_ref)
    ah_ref[...] = ah
    ac_ref[...] = ac

    # content-based attention over encoder memory
    # TODO(synk): location-sensitive conv features omitted (submodule source not given).
    q = jnp.dot(ah.astype(jnp.bfloat16), wq_ref[...],
                preferred_element_type=jnp.float32)                 # [B, A]
    e = jnp.tanh(q[:, None, :] + pmem_ref[...])                     # [B, Tenc, A]
    scores = jnp.sum(e * v_ref[...][None], axis=-1)                 # [B, Tenc]
    scores = scores - jnp.max(scores, axis=-1, keepdims=True)
    pw = jnp.exp(scores)
    attn = pw / jnp.sum(pw, axis=-1, keepdims=True)                 # [B, Tenc]
    ctx_new = jnp.sum(attn[:, :, None] * mem_ref[...], axis=1)      # [B, E]
    ctx_ref[...] = ctx_new

    # decoder LSTM cell (input = [attn_hidden, context])
    xproj_d = (jnp.dot(ah.astype(jnp.bfloat16), wdxh_ref[...],
                       preferred_element_type=jnp.float32)
               + jnp.dot(ctx_new.astype(jnp.bfloat16), wdxc_ref[...],
                         preferred_element_type=jnp.float32))
    dh, dc = _cell(xproj_d, dh_ref[...], dc_ref[...], wdh_ref, bd_ref)
    dh_ref[...] = dh
    dc_ref[...] = dc

    # lane-dense (128-wide) per-step outputs; mel/stop projected after the loop
    dh_out_ref[0] = dh
    ctx_out_ref[0] = ctx_new


def run_decoder(enc_out_btc, target_mels_btm, p):
    B, Tenc, E = enc_out_btc.shape
    Tdec, mel = target_mels_btm.shape[1], target_mels_btm.shape[2]
    A = p["attn_Wq"].shape[1]
    H = p["arnn_wh"].shape[0]
    H2 = p["drnn_wh"].shape[0]

    # processed memory (batched Pallas linear)
    pmem = linear(enc_out_btc.reshape(B * Tenc, E),
                  p["attn_Wm"], p["attn_bm"]).reshape(B, Tenc, A)

    # teacher-forcing inputs: go-frame + shifted targets, time-major
    tm_tbm = jnp.transpose(target_mels_btm, (1, 0, 2))              # [Tdec, B, mel]
    dec_in = jnp.concatenate([jnp.zeros((1, B, mel), jnp.float32), tm_tbm[:-1]],
                             axis=0)

    # prenet (dropout omitted: eval mode) + attention-LSTM x-projection, hoisted
    xpre = prenet_proj(dec_in.reshape(Tdec * B, mel),
                       p["pre_w1"], p["pre_b1"], p["pre_w2"], p["pre_b2"],
                       p["arnn_wxp"]).reshape(Tdec, B, 4 * H)

    bf = lambda a: a.astype(jnp.bfloat16)
    dh_all, ctx_all = pl.pallas_call(
        _decoder_kernel,
        out_shape=(jax.ShapeDtypeStruct((Tdec, B, H2), jnp.float32),
                   jax.ShapeDtypeStruct((Tdec, B, E), jnp.float32)),
        grid=(Tdec,),
        in_specs=[
            pl.BlockSpec((1, B, 4 * H), lambda t: (t, 0, 0)),       # xpre (per step)
            pl.BlockSpec((B, Tenc, E), lambda t: (0, 0, 0)),        # memory
            pl.BlockSpec((B, Tenc, A), lambda t: (0, 0, 0)),        # processed mem
            pl.BlockSpec((E, 4 * H), lambda t: (0, 0)),             # waxc
            pl.BlockSpec((H, 4 * H), lambda t: (0, 0)),             # wah
            pl.BlockSpec((1, 4 * H), lambda t: (0, 0)),             # ba
            pl.BlockSpec((H, A), lambda t: (0, 0)),                 # wq
            pl.BlockSpec((1, A), lambda t: (0, 0)),                 # v
            pl.BlockSpec((H, 4 * H2), lambda t: (0, 0)),            # wdxh
            pl.BlockSpec((E, 4 * H2), lambda t: (0, 0)),            # wdxc
            pl.BlockSpec((H2, 4 * H2), lambda t: (0, 0)),           # wdh
            pl.BlockSpec((1, 4 * H2), lambda t: (0, 0)),            # bd
        ],
        out_specs=(pl.BlockSpec((1, B, H2), lambda t: (t, 0, 0)),
                   pl.BlockSpec((1, B, E), lambda t: (t, 0, 0))),
        scratch_shapes=[
            pltpu.VMEM((B, H), jnp.float32), pltpu.VMEM((B, H), jnp.float32),
            pltpu.VMEM((B, H2), jnp.float32), pltpu.VMEM((B, H2), jnp.float32),
            pltpu.VMEM((B, E), jnp.float32),
        ],
        compiler_params=pltpu.CompilerParams(dimension_semantics=("arbitrary",)),
    )(xpre, enc_out_btc, pmem,
      bf(p["arnn_wxc"]), bf(p["arnn_wh"]), p["arnn_b"].reshape(1, 4 * H),
      bf(p["attn_Wq"]), p["attn_v"].reshape(1, A),
      bf(p["drnn_wxh"]), bf(p["drnn_wxc"]), bf(p["drnn_wh"]),
      p["drnn_b"].reshape(1, 4 * H2))

    # mel + stop projections hoisted out of the loop into one lane-dense matmul
    NP = 128                                                        # 81 -> 128 lanes
    feat = jnp.concatenate([dh_all, ctx_all], axis=-1).reshape(Tdec * B, H2 + E)
    w_ms = jnp.zeros((H2 + E, NP), jnp.float32)
    w_ms = w_ms.at[:H2, :mel].set(p["proj_wh"]).at[H2:, :mel].set(p["proj_wc"])
    w_ms = w_ms.at[:H2, mel].set(p["stop_wh"][:, 0]).at[H2:, mel].set(p["stop_wc"][:, 0])
    b_ms = jnp.zeros((NP,), jnp.float32).at[:mel].set(p["proj_b"]).at[mel].set(p["stop_b"][0])
    y = linear(feat, w_ms, b_ms).reshape(Tdec, B, NP)
    mel_tbm = y[..., :mel]                                          # [Tdec, B, mel]
    stop_tb = y[..., mel]                                           # [Tdec, B]
    return mel_tbm, stop_tb


# ---------------------------------------------------------------------------
# full model
# ---------------------------------------------------------------------------
def tacotron2_forward(text_ids, target_mels, p):
    # embedding lookup (glue gather)
    emb = jnp.take(p["embedding"], text_ids, axis=0)                # [B, Tenc, E]

    # encoder: fused 3x(conv1d + BN + ReLU) in a single pallas_call
    x = conv_stack(emb,
                   [p["enc_w0"], p["enc_w1"], p["enc_w2"]],
                   [p["enc_s0"], p["enc_s1"], p["enc_s2"]],
                   [p["enc_sh0"], p["enc_sh1"], p["enc_sh2"]],
                   acts=("relu", "relu", "relu"))

    # encoder bidirectional LSTM (fused, x-projection hoisted)
    enc_out_btc = bilstm(x, p)                                      # [B, Tenc, E]

    # attention decoder (teacher forcing)
    mel_tbm, stop_tb = run_decoder(enc_out_btc, target_mels, p)
    dec_btm = jnp.transpose(mel_tbm, (1, 0, 2))                     # [B, Tdec, mel]

    # postnet: fused 3-conv stack, channels padded to 128 lanes, residual fused
    mel = dec_btm.shape[-1]
    CP = 128
    dec_pad = jnp.pad(dec_btm, ((0, 0), (0, 0), (0, CP - mel)))
    w0p = jnp.pad(p["post_w0"], ((0, 0), (0, CP - mel), (0, 0)))
    w2p = jnp.pad(p["post_w2"], ((0, 0), (0, 0), (0, CP - mel)))
    s2p = jnp.pad(p["post_s2"], (0, CP - mel))
    h2p = jnp.pad(p["post_sh2"], (0, CP - mel))
    post_pad = conv_stack(dec_pad,
                          [w0p, p["post_w1"], w2p],
                          [p["post_s0"], p["post_s1"], s2p],
                          [p["post_sh0"], p["post_sh1"], h2p],
                          acts=("tanh", "tanh", "none"), residual=True)
    post_btm = post_pad[..., :mel]

    decoder_output = jnp.transpose(dec_btm, (0, 2, 1))              # [B, mel, Tdec]
    post_output = jnp.transpose(post_btm, (0, 2, 1))                # [B, mel, Tdec]
    stop_values = jnp.transpose(stop_tb, (1, 0))                    # [B, Tdec]
    return decoder_output, post_output, stop_values


# ---------------------------------------------------------------------------
# deterministic synthetic parameters (lane-friendly widths: A = P = 128)
# ---------------------------------------------------------------------------
def init_params(key, num_embeddings=83, E=128, mel=80, K=5,
                H_enc=64, P=128, A=128, H=128, H2=128, PN=512):
    keys = iter(jax.random.split(key, 96))

    def nrm(shape, fan_in):
        return jax.random.normal(next(keys), shape, jnp.float32) / jnp.sqrt(float(fan_in))

    p = {}
    p["embedding"] = nrm((num_embeddings, E), E)
    for i in range(3):
        p[f"enc_w{i}"] = nrm((K, E, E), K * E)
        p[f"enc_s{i}"] = 1.0 + 0.01 * jax.random.normal(next(keys), (E,), jnp.float32)
        p[f"enc_sh{i}"] = 0.01 * jax.random.normal(next(keys), (E,), jnp.float32)
    for d in ("f", "b"):
        p[f"lstm_{d}_wx"] = nrm((E, 4 * H_enc), E)
        p[f"lstm_{d}_wh"] = nrm((H_enc, 4 * H_enc), H_enc)
        p[f"lstm_{d}_b"] = jnp.zeros((4 * H_enc,), jnp.float32)

    p["attn_Wm"] = nrm((E, A), E)
    p["attn_bm"] = jnp.zeros((A,), jnp.float32)
    p["pre_w1"] = nrm((mel, P), mel)
    p["pre_b1"] = jnp.zeros((P,), jnp.float32)
    p["pre_w2"] = nrm((P, P), P)
    p["pre_b2"] = jnp.zeros((P,), jnp.float32)
    p["arnn_wxp"] = nrm((P, 4 * H), P)
    p["arnn_wxc"] = nrm((E, 4 * H), E)
    p["arnn_wh"] = nrm((H, 4 * H), H)
    p["arnn_b"] = jnp.zeros((4 * H,), jnp.float32)
    p["attn_Wq"] = nrm((H, A), H)
    p["attn_v"] = nrm((A,), A)
    p["drnn_wxh"] = nrm((H, 4 * H2), H)
    p["drnn_wxc"] = nrm((E, 4 * H2), E)
    p["drnn_wh"] = nrm((H2, 4 * H2), H2)
    p["drnn_b"] = jnp.zeros((4 * H2,), jnp.float32)
    p["proj_wh"] = nrm((H2, mel), H2)
    p["proj_wc"] = nrm((E, mel), E)
    p["proj_b"] = jnp.zeros((mel,), jnp.float32)
    p["stop_wh"] = nrm((H2, 1), H2)
    p["stop_wc"] = nrm((E, 1), E)
    p["stop_b"] = jnp.zeros((1,), jnp.float32)

    chans = [mel, PN, PN, mel]
    for i in range(3):
        p[f"post_w{i}"] = nrm((K, chans[i], chans[i + 1]), K * chans[i])
        p[f"post_s{i}"] = 1.0 + 0.01 * jax.random.normal(next(keys), (chans[i + 1],), jnp.float32)
        p[f"post_sh{i}"] = 0.01 * jax.random.normal(next(keys), (chans[i + 1],), jnp.float32)
    return p


if __name__ == "__main__":
    key = jax.random.PRNGKey(0)
    k_params, k_text, k_mel = jax.random.split(key, 3)

    params = init_params(k_params)

    B, T_enc, T_dec, MEL = 2, 12, 16, 80
    # inputs are already padded (nn.utils.rnn.pad_sequence is done outside the kernel)
    text = jax.random.randint(k_text, (B, T_enc), 0, 83, dtype=jnp.int32)
    target_mels = jax.random.normal(k_mel, (B, T_dec, MEL), jnp.float32)

    dec_out, post_out, stop_values = tacotron2_forward(text, target_mels, params)
    jax.block_until_ready((dec_out, post_out, stop_values))

    assert dec_out.shape == (B, MEL, T_dec)
    assert post_out.shape == (B, MEL, T_dec)
    assert stop_values.shape == (B, T_dec)
    assert jnp.all(jnp.isfinite(dec_out)) and jnp.all(jnp.isfinite(post_out))
    print("KERNEL_OK")
</pallas_src>

<mosaic_0001>
module attributes {stable_mosaic.version = 11 : i64} {
  func.func @_conv_stack_kernel(%arg0: i32, %arg1: memref<1x16x128xf32, #tpu.memory_space<vmem>>, %arg2: memref<640x128xbf16, #tpu.memory_space<vmem>>, %arg3: memref<1x128xf32, #tpu.memory_space<vmem>>, %arg4: memref<1x128xf32, #tpu.memory_space<vmem>>, %arg5: memref<640x128xbf16, #tpu.memory_space<vmem>>, %arg6: memref<1x128xf32, #tpu.memory_space<vmem>>, %arg7: memref<1x128xf32, #tpu.memory_space<vmem>>, %arg8: memref<640x128xbf16, #tpu.memory_space<vmem>>, %arg9: memref<1x128xf32, #tpu.memory_space<vmem>>, %arg10: memref<1x128xf32, #tpu.memory_space<vmem>>, %arg11: memref<1x12x128xf32, #tpu.memory_space<vmem>>, %arg12: memref<16x128xf32, #tpu.memory_space<vmem>>, %arg13: memref<16x128xf32, #tpu.memory_space<vmem>>) attributes {dimension_semantics = [#tpu.dimension_semantics<parallel>], iteration_bounds = array<i64: 2>, scalar_prefetch = 0 : i64, scratch_operands = 2 : i64, tpu.core_type = #tpu.core_type<tc>, window_params = [{transform_indices = @transform_0, window_bounds = array<i64: 1, 16, 128>}, {pipeline_mode = #tpu.pipeline_mode<synchronous>, transform_indices = @transform_1, window_bounds = array<i64: 640, 128>}, {pipeline_mode = #tpu.pipeline_mode<synchronous>, transform_indices = @transform_2, window_bounds = array<i64: 1, 128>}, {pipeline_mode = #tpu.pipeline_mode<synchronous>, transform_indices = @transform_3, window_bounds = array<i64: 1, 128>}, {pipeline_mode = #tpu.pipeline_mode<synchronous>, transform_indices = @transform_4, window_bounds = array<i64: 640, 128>}, {pipeline_mode = #tpu.pipeline_mode<synchronous>, transform_indices = @transform_5, window_bounds = array<i64: 1, 128>}, {pipeline_mode = #tpu.pipeline_mode<synchronous>, transform_indices = @transform_6, window_bounds = array<i64: 1, 128>}, {pipeline_mode = #tpu.pipeline_mode<synchronous>, transform_indices = @transform_7, window_bounds = array<i64: 640, 128>}, {pipeline_mode = #tpu.pipeline_mode<synchronous>, transform_indices = @transform_8, window_bounds = array<i64: 1, 128>}, {pipeline_mode = #tpu.pipeline_mode<synchronous>, transform_indices = @transform_9, window_bounds = array<i64: 1, 128>}, {transform_indices = @transform_10, window_bounds = array<i64: 1, 12, 128>}]} {
    %c0 = arith.constant 0 : index
    %c0_0 = arith.constant 0 : index
    %c0_1 = arith.constant 0 : index
    %0 = vector.load %arg1[%c0, %c0_0, %c0_1] : memref<1x16x128xf32, #tpu.memory_space<vmem>>, vector<1x16x128xf32>
    %1 = vector.shape_cast %0 : vector<1x16x128xf32> to vector<16x128xf32>
    %2 = vector.extract_strided_slice %1 {offsets = [0, 0], sizes = [12, 128], strides = [1, 1]} : vector<16x128xf32> to vector<12x128xf32>
    %3 = vector.extract_strided_slice %1 {offsets = [1, 0], sizes = [12, 128], strides = [1, 1]} : vector<16x128xf32> to vector<12x128xf32>
    %4 = vector.extract_strided_slice %1 {offsets = [2, 0], sizes = [12, 128], strides = [1, 1]} : vector<16x128xf32> to vector<12x128xf32>
    %5 = vector.extract_strided_slice %1 {offsets = [3, 0], sizes = [12, 128], strides = [1, 1]} : vector<16x128xf32> to vector<12x128xf32>
    %6 = vector.extract_strided_slice %1 {offsets = [4, 0], sizes = [12, 128], strides = [1, 1]} : vector<16x128xf32> to vector<12x128xf32>
    %7 = tpu.concatenate %2, %3, %4, %5, %6 in 1 : vector<12x128xf32>, vector<12x128xf32>, vector<12x128xf32>, vector<12x128xf32>, vector<12x128xf32> -> vector<12x640xf32>
    %8 = arith.truncf %7 : vector<12x640xf32> to vector<12x640xbf16>
    %c0_2 = arith.constant 0 : index
    %c0_3 = arith.constant 0 : index
    %9 = vector.load %arg2[%c0_2, %c0_3] : memref<640x128xbf16, #tpu.memory_space<vmem>>, vector<640x128xbf16>
    %cst = arith.constant dense<0.000000e+00> : vector<12x128xf32>
    %10 = tpu.matmul %8, %9, %cst {dimension_numbers = #tpu.dot_dimension_numbers<[1], [0], [0], [1], [0, 0, 1, 1], [], []>} : vector<12x640xbf16>, vector<640x128xbf16>, vector<12x128xf32> -> vector<12x128xf32>
    %c0_4 = arith.constant 0 : index
    %c0_5 = arith.constant 0 : index
    %11 = vector.load %arg3[%c0_4, %c0_5] : memref<1x128xf32, #tpu.memory_space<vmem>>, vector<1x128xf32>
    %12 = vector.broadcast %11 : vector<1x128xf32> to vector<12x128xf32>
    %13 = arith.mulf %10, %12 : vector<12x128xf32>
    %c0_6 = arith.constant 0 : index
    %c0_7 = arith.constant 0 : index
    %14 = vector.load %arg4[%c0_6, %c0_7] : memref<1x128xf32, #tpu.memory_space<vmem>>, vector<1x128xf32>
    %15 = vector.broadcast %14 : vector<1x128xf32> to vector<12x128xf32>
    %16 = arith.addf %13, %15 : vector<12x128xf32>
    %cst_8 = arith.constant 0.000000e+00 : f32
    %17 = vector.broadcast %cst_8 : f32 to vector<12x128xf32>
    %18 = arith.maximumf %16, %17 : vector<12x128xf32>
    %cst_9 = arith.constant 0.000000e+00 : f32
    %19 = vector.broadcast %cst_9 : f32 to vector<16x128xf32>
    %c0_10 = arith.constant 0 : index
    %c0_11 = arith.constant 0 : index
    %20 = vector.load %arg12[%c0_10, %c0_11] : memref<16x128xf32, #tpu.memory_space<vmem>>, vector<16x128xf32>
    tpu.vector_store %arg12[%c0_10, %c0_11], %19 {strides = array<i32>} : memref<16x128xf32, #tpu.memory_space<vmem>>, vector<16x128xf32>,
    %c2 = arith.constant 2 : index
    %c0_12 = arith.constant 0 : index
    %21 = vector.load %arg12[%c2, %c0_12] : memref<16x128xf32, #tpu.memory_space<vmem>>, vector<12x128xf32>
    tpu.vector_store %arg12[%c2, %c0_12], %18 {strides = array<i32>} : memref<16x128xf32, #tpu.memory_space<vmem>>, vector<12x128xf32>,
    %c0_13 = arith.constant 0 : index
    %c0_14 = arith.constant 0 : index
    %22 = vector.load %arg12[%c0_13, %c0_14] : memref<16x128xf32, #tpu.memory_space<vmem>>, vector<16x128xf32>
    %23 = vector.extract_strided_slice %22 {offsets = [0, 0], sizes = [12, 128], strides = [1, 1]} : vector<16x128xf32> to vector<12x128xf32>
    %24 = vector.extract_strided_slice %22 {offsets = [1, 0], sizes = [12, 128], strides = [1, 1]} : vector<16x128xf32> to vector<12x128xf32>
    %25 = vector.extract_strided_slice %22 {offsets = [2, 0], sizes = [12, 128], strides = [1, 1]} : vector<16x128xf32> to vector<12x128xf32>
    %26 = vector.extract_strided_slice %22 {offsets = [3, 0], sizes = [12, 128], strides = [1, 1]} : vector<16x128xf32> to vector<12x128xf32>
    %27 = vector.extract_strided_slice %22 {offsets = [4, 0], sizes = [12, 128], strides = [1, 1]} : vector<16x128xf32> to vector<12x128xf32>
    %28 = tpu.concatenate %23, %24, %25, %26, %27 in 1 : vector<12x128xf32>, vector<12x128xf32>, vector<12x128xf32>, vector<12x128xf32>, vector<12x128xf32> -> vector<12x640xf32>
    %29 = arith.truncf %28 : vector<12x640xf32> to vector<12x640xbf16>
    %c0_15 = arith.constant 0 : index
    %c0_16 = arith.constant 0 : index
    %30 = vector.load %arg5[%c0_15, %c0_16] : memref<640x128xbf16, #tpu.memory_space<vmem>>, vector<640x128xbf16>
    %cst_17 = arith.constant dense<0.000000e+00> : vector<12x128xf32>
    %31 = tpu.matmul %29, %30, %cst_17 {dimension_numbers = #tpu.dot_dimension_numbers<[1], [0], [0], [1], [0, 0, 1, 1], [], []>} : vector<12x640xbf16>, vector<640x128xbf16>, vector<12x128xf32> -> vector<12x128xf32>
    %c0_18 = arith.constant 0 : index
    %c0_19 = arith.constant 0 : index
    %32 = vector.load %arg6[%c0_18, %c0_19] : memref<1x128xf32, #tpu.memory_space<vmem>>, vector<1x128xf32>
    %33 = vector.broadcast %32 : vector<1x128xf32> to vector<12x128xf32>
    %34 = arith.mulf %31, %33 : vector<12x128xf32>
    %c0_20 = arith.constant 0 : index
    %c0_21 = arith.constant 0 : index
    %35 = vector.load %arg7[%c0_20, %c0_21] : memref<1x128xf32, #tpu.memory_space<vmem>>, vector<1x128xf32>
    %36 = vector.broadcast %35 : vector<1x128xf32> to vector<12x128xf32>
    %37 = arith.addf %34, %36 : vector<12x128xf32>
    %cst_22 = arith.constant 0.000000e+00 : f32
    %38 = vector.broadcast %cst_22 : f32 to vector<12x128xf32>
    %39 = arith.maximumf %37, %38 : vector<12x128xf32>
    %cst_23 = arith.constant 0.000000e+00 : f32
    %40 = vector.broadcast %cst_23 : f32 to vector<16x128xf32>
    %c0_24 = arith.constant 0 : index
    %c0_25 = arith.constant 0 : index
    %41 = vector.load %arg13[%c0_24, %c0_25] : memref<16x128xf32, #tpu.memory_space<vmem>>, vector<16x128xf32>
    tpu.vector_store %arg13[%c0_24, %c0_25], %40 {strides = array<i32>} : memref<16x128xf32, #tpu.memory_space<vmem>>, vector<16x128xf32>,
    %c2_26 = arith.constant 2 : index
    %c0_27 = arith.constant 0 : index
    %42 = vector.load %arg13[%c2_26, %c0_27] : memref<16x128xf32, #tpu.memory_space<vmem>>, vector<12x128xf32>
    tpu.vector_store %arg13[%c2_26, %c0_27], %39 {strides = array<i32>} : memref<16x128xf32, #tpu.memory_space<vmem>>, vector<12x128xf32>,
    %c0_28 = arith.constant 0 : index
    %c0_29 = arith.constant 0 : index
    %43 = vector.load %arg13[%c0_28, %c0_29] : memref<16x128xf32, #tpu.memory_space<vmem>>, vector<16x128xf32>
    %44 = vector.extract_strided_slice %43 {offsets = [0, 0], sizes = [12, 128], strides = [1, 1]} : vector<16x128xf32> to vector<12x128xf32>
    %45 = vector.extract_strided_slice %43 {offsets = [1, 0], sizes = [12, 128], strides = [1, 1]} : vector<16x128xf32> to vector<12x128xf32>
    %46 = vector.extract_strided_slice %43 {offsets = [2, 0], sizes = [12, 128], strides = [1, 1]} : vector<16x128xf32> to vector<12x128xf32>
    %47 = vector.extract_strided_slice %43 {offsets = [3, 0], sizes = [12, 128], strides = [1, 1]} : vector<16x128xf32> to vector<12x128xf32>
    %48 = vector.extract_strided_slice %43 {offsets = [4, 0], sizes = [12, 128], strides = [1, 1]} : vector<16x128xf32> to vector<12x128xf32>
    %49 = tpu.concatenate %44, %45, %46, %47, %48 in 1 : vector<12x128xf32>, vector<12x128xf32>, vector<12x128xf32>, vector<12x128xf32>, vector<12x128xf32> -> vector<12x640xf32>
    %50 = arith.truncf %49 : vector<12x640xf32> to vector<12x640xbf16>
    %c0_30 = arith.constant 0 : index
    %c0_31 = arith.constant 0 : index
    %51 = vector.load %arg8[%c0_30, %c0_31] : memref<640x128xbf16, #tpu.memory_space<vmem>>, vector<640x128xbf16>
    %cst_32 = arith.constant dense<0.000000e+00> : vector<12x128xf32>
    %52 = tpu.matmul %50, %51, %cst_32 {dimension_numbers = #tpu.dot_dimension_numbers<[1], [0], [0], [1], [0, 0, 1, 1], [], []>} : vector<12x640xbf16>, vector<640x128xbf16>, vector<12x128xf32> -> vector<12x128xf32>
    %c0_33 = arith.constant 0 : index
    %c0_34 = arith.constant 0 : index
    %53 = vector.load %arg9[%c0_33, %c0_34] : memref<1x128xf32, #tpu.memory_space<vmem>>, vector<1x128xf32>
    %54 = vector.broadcast %53 : vector<1x128xf32> to vector<12x128xf32>
    %55 = arith.mulf %52, %54 : vector<12x128xf32>
    %c0_35 = arith.constant 0 : index
    %c0_36 = arith.constant 0 : index
    %56 = vector.load %arg10[%c0_35, %c0_36] : memref<1x128xf32, #tpu.memory_space<vmem>>, vector<1x128xf32>
    %57 = vector.broadcast %56 : vector<1x128xf32> to vector<12x128xf32>
    %58 = arith.addf %55, %57 : vector<12x128xf32>
    %cst_37 = arith.constant 0.000000e+00 : f32
    %59 = vector.broadcast %cst_37 : f32 to vector<12x128xf32>
    %60 = arith.maximumf %58, %59 : vector<12x128xf32>
    %c0_38 = arith.constant 0 : index
    %c0_39 = arith.constant 0 : index
    %c0_40 = arith.constant 0 : index
    %61 = vector.load %arg11[%c0_38, %c0_39, %c0_40] : memref<1x12x128xf32, #tpu.memory_space<vmem>>, vector<1x12x128xf32>
    %62 = vector.shape_cast %61 : vector<1x12x128xf32> to vector<12x128xf32>
    %63 = vector.shape_cast %60 : vector<12x128xf32> to vector<1x12x128xf32>
    tpu.vector_store %arg11[%c0_38, %c0_39, %c0_40], %63 {strides = array<i32>} : memref<1x12x128xf32, #tpu.memory_space<vmem>>, vector<1x12x128xf32>,
    return
  }
  func.func @transform_0(%arg0: i32) -> (i32, i32, i32) {
    %c0_i32 = arith.constant 0 : i32
    %c0_i32_0 = arith.constant 0 : i32
    %c0_i32_1 = arith.constant 0 : i32
    return %arg0, %c0_i32, %c0_i32_0 : i32, i32, i32
  }
  func.func @transform_1(%arg0: i32) -> (i32, i32) {
    %c0_i32 = arith.constant 0 : i32
    %c0_i32_0 = arith.constant 0 : i32
    %c0_i32_1 = arith.constant 0 : i32
    return %c0_i32, %c0_i32_0 : i32, i32
  }
  func.func @transform_2(%arg0: i32) -> (i32, i32) {
    %c0_i32 = arith.constant 0 : i32
    %c0_i32_0 = arith.constant 0 : i32
    %c0_i32_1 = arith.constant 0 : i32
    return %c0_i32, %c0_i32_0 : i32, i32
  }
  func.func @transform_3(%arg0: i32) -> (i32, i32) {
    %c0_i32 = arith.constant 0 : i32
    %c0_i32_0 = arith.constant 0 : i32
    %c0_i32_1 = arith.constant 0 : i32
    return %c0_i32, %c0_i32_0 : i32, i32
  }
  func.func @transform_4(%arg0: i32) -> (i32, i32) {
    %c0_i32 = arith.constant 0 : i32
    %c0_i32_0 = arith.constant 0 : i32
    %c0_i32_1 = arith.constant 0 : i32
    return %c0_i32, %c0_i32_0 : i32, i32
  }
  func.func @transform_5(%arg0: i32) -> (i32, i32) {
    %c0_i32 = arith.constant 0 : i32
    %c0_i32_0 = arith.constant 0 : i32
    %c0_i32_1 = arith.constant 0 : i32
    return %c0_i32, %c0_i32_0 : i32, i32
  }
  func.func @transform_6(%arg0: i32) -> (i32, i32) {
    %c0_i32 = arith.constant 0 : i32
    %c0_i32_0 = arith.constant 0 : i32
    %c0_i32_1 = arith.constant 0 : i32
    return %c0_i32, %c0_i32_0 : i32, i32
  }
  func.func @transform_7(%arg0: i32) -> (i32, i32) {
    %c0_i32 = arith.constant 0 : i32
    %c0_i32_0 = arith.constant 0 : i32
    %c0_i32_1 = arith.constant 0 : i32
    return %c0_i32, %c0_i32_0 : i32, i32
  }
  func.func @transform_8(%arg0: i32) -> (i32, i32) {
    %c0_i32 = arith.constant 0 : i32
    %c0_i32_0 = arith.constant 0 : i32
    %c0_i32_1 = arith.constant 0 : i32
    return %c0_i32, %c0_i32_0 : i32, i32
  }
  func.func @transform_9(%arg0: i32) -> (i32, i32) {
    %c0_i32 = arith.constant 0 : i32
    %c0_i32_0 = arith.constant 0 : i32
    %c0_i32_1 = arith.constant 0 : i32
    return %c0_i32, %c0_i32_0 : i32, i32
  }
  func.func @transform_10(%arg0: i32) -> (i32, i32, i32) {
    %c0_i32 = arith.constant 0 : i32
    %c0_i32_0 = arith.constant 0 : i32
    %c0_i32_1 = arith.constant 0 : i32
    return %arg0, %c0_i32, %c0_i32_0 : i32, i32, i32
  }
}

</mosaic_0001>

<llo_original>
// kernel: tpu_custom_call.1
$region0: #{tpu_custom_call.1}
  #allocation0 [shape = 'u32[]', space=smem, size = 0x4, offset = 0x4, fixed_abs, tag = 'smem constant byte address 0x4 - core index']
  #allocation1 [shape = 'u32[144,128]{1,0:T(1,128)}', space=vmem, size = 0x12000, scoped, tag = 'internal scratch']
  #allocation2 [shape = 'f32[16,128]{1,0:T(8,128)}', space=vmem, size = 0x2000, scoped, tag = 'scratch operand']
  #allocation3 [shape = 'f32[16,128]{1,0:T(8,128)}', space=vmem, size = 0x2000, scoped, tag = 'scratch operand']
  %s0 = inlined_call_operand.hbm [shape: f32[2,16,128], index: 0, kind: input, shape index: {}]
  %s1 = inlined_call_operand.hbm [shape: bf16[640,128], index: 1, kind: input, shape index: {}]
  %s2 = inlined_call_operand.vmem [shape: f32[1,128], index: 2, kind: input, shape index: {}]
  %s3 = inlined_call_operand.vmem [shape: f32[1,128], index: 3, kind: input, shape index: {}]
  %s4 = inlined_call_operand.hbm [shape: bf16[640,128], index: 4, kind: input, shape index: {}]
  %s5 = inlined_call_operand.vmem [shape: f32[1,128], index: 5, kind: input, shape index: {}]
  %s6 = inlined_call_operand.vmem [shape: f32[1,128], index: 6, kind: input, shape index: {}]
  %s7 = inlined_call_operand.hbm [shape: bf16[640,128], index: 7, kind: input, shape index: {}]
  %s8 = inlined_call_operand.vmem [shape: f32[1,128], index: 8, kind: input, shape index: {}]
  %s9 = inlined_call_operand.vmem [shape: f32[1,128], index: 9, kind: input, shape index: {}]
  %s10 = inlined_call_operand.vmem [shape: f32[2,12,128], index: 10, kind: output, shape index: {}]
  %s11 = sld [smem:[#allocation0]]
  $region89: #{tpu_custom_call.1} parent=0
    _
  %s13 = ssub.s32 1, %s11
  %s14 = scalar_select 0, %s13, %s11
  $region1: #{tpu_custom_call.1} parent=0
    #allocation4 [shape = 'u8[16384]{0}', space=vmem, size = 0x4000, scoped, tag = 'input window, operand 0']
    #allocation5 [shape = 's32[2]{0}', space=sflag, size = 0x8, scoped, tag = 'scoped memory for tpu_custom_call.1']
    #allocation6 [shape = 'u8[163840]{0}', space=vmem, size = 0x28000, scoped, tag = 'input window, operand 1, single buffered']
    #allocation7 [shape = 's32[1]{0}', space=sflag, size = 0x4, scoped, tag = 'scoped memory for tpu_custom_call.1']
    #allocation8 [shape = 'u8[163840]{0}', space=vmem, size = 0x28000, scoped, tag = 'input window, operand 4, single buffered']
    #allocation9 [shape = 'u8[163840]{0}', space=vmem, size = 0x28000, scoped, tag = 'input window, operand 7, single buffered']
    #allocation10 [shape = 's32[1]{0}', space=sflag, size = 0x4, scoped, tag = 'scoped memory for tpu_custom_call.1']
    %15 = vsyncpa [#allocation5], 0
    %s16 = scalar_lea.sflag [#allocation5], 1
    %17 = vsyncpa %s16, 0
    %18 = vsyncpa [#allocation7], 0
    %19 = vsyncpa [#allocation10], 0
    loop: start=0, step=1, limit=4
    $region2: #{tpu_custom_call.1} parent=1 // loop_pre_header
      _
    $region3: #{tpu_custom_call.1} parent=1 // loop_header
      %s21 = sphi 0, %s25
      %p22 = scmp.ge.s32.totalorder %s21, 4
      %s31 = sphi 0, %s33
      %s34 = sphi 0, %s31
      %s35 = sphi 0, %s34
      %s51 = sphi 0, %s35
      %s55 = sphi 0, %s55
      %s57 = sphi 0, %s55
      %s58 = sphi 0, %s57
      %s72 = sphi 0, %s58
      %s76 = sphi 0, %s76
      %s78 = sphi 0, %s76
      %s79 = sphi 0, %s78
      %s93 = sphi 0, %s79
      %s97 = sphi 0, %s97
      %s99 = sphi 0, %s97
      %s100 = sphi 0, %s99
      %s114 = sphi 0, %s100
      %s118 = sphi 0, %s118
      %s120 = sphi 0, %s118
      %s121 = sphi 0, %s120
      %s135 = sphi 0, %s121
      %s139 = sphi 0, %s139
      %s141 = sphi 0, %s139
      %s142 = sphi 0, %s141
      %s156 = sphi 0, %s142
      %s160 = sphi 0, %s160
      %s162 = sphi 0, %s160
      %s163 = sphi 0, %s162
      %s177 = sphi 0, %s163
      %s181 = sphi 0, %s181
      %s183 = sphi 0, %s181
      %s184 = sphi 0, %s183
      %s198 = sphi 0, %s184
      %s202 = sphi 0, %s202
      %s204 = sphi 0, %s202
      %s205 = sphi 0, %s204
      %s219 = sphi 0, %s205
      %s223 = sphi 0, %s223
      %s225 = sphi 0, %s223
      %s226 = sphi 0, %s225
      %s240 = sphi 0, %s226
      %s246 = sphi 0, %s248
      %s249 = sphi 0, %s246
      %s250 = sphi 0, %s249
      %s266 = sphi 0, %s250
    $region4: #{tpu_custom_call.1} parent=1 // loop_header_branch
      %24 = sbr.rel (%p22) target = $region8
    $region5: #{tpu_custom_call.1} parent=1 // loop_body
      %s26 = ssub.s32 %s21, 1
      %s27 = ssub.s32 %s21, 2
      %s28 = sadd.s32 %s21, 1
      %s29 = ssub.s32 %s21, %s28
      %p30 = scmp.eq.s32.totalorder %s29, 0
      %s32 = sadd.s32 %s31, 1
      %s33 = scalar_select %p30, %s31, %s32
      %p36 = pneg %p30
      %p37 = scmp.eq.s32.totalorder %s21, 1
      %p38 = por %p36, %p37
      %p39 = scmp.ne.s32.totalorder %s31, %s34
      %p40 = scmp.eq.s32.totalorder %s21, 0
      %p41 = por %p39, %p40
      %p42 = scmp.ne.s32.totalorder %s31, %s34
      %p43 = scmp.eq.s32.totalorder %s26, 1
      %p44 = por %p42, %p43
      %p45 = scmp.ne.s32.totalorder %s34, %s35
      %p46 = scmp.eq.s32.totalorder %s26, 0
      %p47 = por %p45, %p46
      %p48 = scmp.ne.s32.totalorder %s34, %s35
      %p49 = scmp.eq.s32.totalorder %s27, 1
      %p50 = por %p48, %p49
      %p52 = scmp.ne.s32.totalorder %s35, %s51
      %p53 = scmp.eq.s32.totalorder %s27, 0
      %p54 = por %p52, %p53
      %s56 = sadd.s32 %s55, 1
      %p59 = scmp.eq.s32.totalorder %s21, 1
      %p60 = scmp.ne.s32.totalorder %s55, %s57
      %p61 = scmp.eq.s32.totalorder %s21, 0
      %p62 = por %p60, %p61
      %p63 = scmp.ne.s32.totalorder %s55, %s57
      %p64 = scmp.eq.s32.totalorder %s26, 1
      %p65 = por %p63, %p64
      %p66 = scmp.ne.s32.totalorder %s57, %s58
      %p67 = scmp.eq.s32.totalorder %s26, 0
      %p68 = por %p66, %p67
      %p69 = scmp.ne.s32.totalorder %s57, %s58
      %p70 = scmp.eq.s32.totalorder %s27, 1
      %p71 = por %p69, %p70
      %p73 = scmp.ne.s32.totalorder %s58, %s72
      %p74 = scmp.eq.s32.totalorder %s27, 0
      %p75 = por %p73, %p74
      %s77 = sadd.s32 %s76, 1
      %p80 = scmp.eq.s32.totalorder %s21, 1
      %p81 = scmp.ne.s32.totalorder %s76, %s78
      %p82 = scmp.eq.s32.totalorder %s21, 0
      %p83 = por %p81, %p82
      %p84 = scmp.ne.s32.totalorder %s76, %s78
      %p85 = scmp.eq.s32.totalorder %s26, 1
      %p86 = por %p84, %p85
      %p87 = scmp.ne.s32.totalorder %s78, %s79
      %p88 = scmp.eq.s32.totalorder %s26, 0
      %p89 = por %p87, %p88
      %p90 = scmp.ne.s32.totalorder %s78, %s79
      %p91 = scmp.eq.s32.totalorder %s27, 1
      %p92 = por %p90, %p91
      %p94 = scmp.ne.s32.totalorder %s79, %s93
      %p95 = scmp.eq.s32.totalorder %s27, 0
      %p96 = por %p94, %p95
      %s98 = sadd.s32 %s97, 1
      %p101 = scmp.eq.s32.totalorder %s21, 1
      %p102 = scmp.ne.s32.totalorder %s97, %s99
      %p103 = scmp.eq.s32.totalorder %s21, 0
      %p104 = por %p102, %p103
      %p105 = scmp.ne.s32.totalorder %s97, %s99
      %p106 = scmp.eq.s32.totalorder %s26, 1
      %p107 = por %p105, %p106
      %p108 = scmp.ne.s32.totalorder %s99, %s100
      %p109 = scmp.eq.s32.totalorder %s26, 0
      %p110 = por %p108, %p109
      %p111 = scmp.ne.s32.totalorder %s99, %s100
      %p112 = scmp.eq.s32.totalorder %s27, 1
      %p113 = por %p111, %p112
      %p115 = scmp.ne.s32.totalorder %s100, %s114
      %p116 = scmp.eq.s32.totalorder %s27, 0
      %p117 = por %p115, %p116
      %s119 = sadd.s32 %s118, 1
      %p122 = scmp.eq.s32.totalorder %s21, 1
      %p123 = scmp.ne.s32.totalorder %s118, %s120
      %p124 = scmp.eq.s32.totalorder %s21, 0
      %p125 = por %p123, %p124
      %p126 = scmp.ne.s32.totalorder %s118, %s120
      %p127 = scmp.eq.s32.totalorder %s26, 1
      %p128 = por %p126, %p127
      %p129 = scmp.ne.s32.totalorder %s120, %s121
      %p130 = scmp.eq.s32.totalorder %s26, 0
      %p131 = por %p129, %p130
      %p132 = scmp.ne.s32.totalorder %s120, %s121
      %p133 = scmp.eq.s32.totalorder %s27, 1
      %p134 = por %p132, %p133
      %p136 = scmp.ne.s32.totalorder %s121, %s135
      %p137 = scmp.eq.s32.totalorder %s27, 0
      %p138 = por %p136, %p137
      %s140 = sadd.s32 %s139, 1
      %p143 = scmp.eq.s32.totalorder %s21, 1
      %p144 = scmp.ne.s32.totalorder %s139, %s141
      %p145 = scmp.eq.s32.totalorder %s21, 0
      %p146 = por %p144, %p145
      %p147 = scmp.ne.s32.totalorder %s139, %s141
      %p148 = scmp.eq.s32.totalorder %s26, 1
      %p149 = por %p147, %p148
      %p150 = scmp.ne.s32.totalorder %s141, %s142
      %p151 = scmp.eq.s32.totalorder %s26, 0
      %p152 = por %p150, %p151
      %p153 = scmp.ne.s32.totalorder %s141, %s142
      %p154 = scmp.eq.s32.totalorder %s27, 1
      %p155 = por %p153, %p154
      %p157 = scmp.ne.s32.totalorder %s142, %s156
      %p158 = scmp.eq.s32.totalorder %s27, 0
      %p159 = por %p157, %p158
      %s161 = sadd.s32 %s160, 1
      %p164 = scmp.eq.s32.totalorder %s21, 1
      %p165 = scmp.ne.s32.totalorder %s160, %s162
      %p166 = scmp.eq.s32.totalorder %s21, 0
      %p167 = por %p165, %p166
      %p168 = scmp.ne.s32.totalorder %s160, %s162
      %p169 = scmp.eq.s32.totalorder %s26, 1
      %p170 = por %p168, %p169
      %p171 = scmp.ne.s32.totalorder %s162, %s163
      %p172 = scmp.eq.s32.totalorder %s26, 0
      %p173 = por %p171, %p172
      %p174 = scmp.ne.s32.totalorder %s162, %s163
      %p175 = scmp.eq.s32.totalorder %s27, 1
      %p176 = por %p174, %p175
      %p178 = scmp.ne.s32.totalorder %s163, %s177
      %p179 = scmp.eq.s32.totalorder %s27, 0
      %p180 = por %p178, %p179
      %s182 = sadd.s32 %s181, 1
      %p185 = scmp.eq.s32.totalorder %s21, 1
      %p186 = scmp.ne.s32.totalorder %s181, %s183
      %p187 = scmp.eq.s32.totalorder %s21, 0
      %p188 = por %p186, %p187
      %p189 = scmp.ne.s32.totalorder %s181, %s183
      %p190 = scmp.eq.s32.totalorder %s26, 1
      %p191 = por %p189, %p190
      %p192 = scmp.ne.s32.totalorder %s183, %s184
      %p193 = scmp.eq.s32.totalorder %s26, 0
      %p194 = por %p192, %p193
      %p195 = scmp.ne.s32.totalorder %s183, %s184
      %p196 = scmp.eq.s32.totalorder %s27, 1
      %p197 = por %p195, %p196
      %p199 = scmp.ne.s32.totalorder %s184, %s198
      %p200 = scmp.eq.s32.totalorder %s27, 0
      %p201 = por %p199, %p200
      %s203 = sadd.s32 %s202, 1
      %p206 = scmp.eq.s32.totalorder %s21, 1
      %p207 = scmp.ne.s32.totalorder %s202, %s204
      %p208 = scmp.eq.s32.totalorder %s21, 0
      %p209 = por %p207, %p208
      %p210 = scmp.ne.s32.totalorder %s202, %s204
      %p211 = scmp.eq.s32.totalorder %s26, 1
      %p212 = por %p210, %p211
      %p213 = scmp.ne.s32.totalorder %s204, %s205
      %p214 = scmp.eq.s32.totalorder %s26, 0
      %p215 = por %p213, %p214
      %p216 = scmp.ne.s32.totalorder %s204, %s205
      %p217 = scmp.eq.s32.totalorder %s27, 1
      %p218 = por %p216, %p217
      %p220 = scmp.ne.s32.totalorder %s205, %s219
      %p221 = scmp.eq.s32.totalorder %s27, 0
      %p222 = por %p220, %p221
      %s224 = sadd.s32 %s223, 1
      %p227 = scmp.eq.s32.totalorder %s21, 1
      %p228 = scmp.ne.s32.totalorder %s223, %s225
      %p229 = scmp.eq.s32.totalorder %s21, 0
      %p230 = por %p228, %p229
      %p231 = scmp.ne.s32.totalorder %s223, %s225
      %p232 = scmp.eq.s32.totalorder %s26, 1
      %p233 = por %p231, %p232
      %p234 = scmp.ne.s32.totalorder %s225, %s226
      %p235 = scmp.eq.s32.totalorder %s26, 0
      %p236 = por %p234, %p235
      %p237 = scmp.ne.s32.totalorder %s225, %s226
      %p238 = scmp.eq.s32.totalorder %s27, 1
      %p239 = por %p237, %p238
      %p241 = scmp.ne.s32.totalorder %s226, %s240
      %p242 = scmp.eq.s32.totalorder %s27, 0
      %p243 = por %p241, %p242
      %s244 = ssub.s32 %s21, %s28
      %p245 = scmp.eq.s32.totalorder %s244, 0
      %s247 = sadd.s32 %s246, 1
      %s248 = scalar_select %p245, %s246, %s247
      %p251 = pneg %p245
      %p252 = scmp.eq.s32.totalorder %s21, 1
      %p253 = por %p251, %p252
      %p254 = scmp.ne.s32.totalorder %s246, %s249
      %p255 = scmp.eq.s32.totalorder %s21, 0
      %p256 = por %p254, %p255
      %p257 = scmp.ne.s32.totalorder %s246, %s249
      %p258 = scmp.eq.s32.totalorder %s26, 1
      %p259 = por %p257, %p258
      %p260 = scmp.ne.s32.totalorder %s249, %s250
      %p261 = scmp.eq.s32.totalorder %s26, 0
      %p262 = por %p260, %p261
      %p263 = scmp.ne.s32.totalorder %s249, %s250
      %p264 = scmp.eq.s32.totalorder %s27, 1
      %p265 = por %p263, %p264
      %p267 = scmp.ne.s32.totalorder %s250, %s266
      %p268 = scmp.eq.s32.totalorder %s27, 0
      %p269 = por %p267, %p268
      %p270 = scmp.le.s32.totalorder 1, %s21
      %p271 = scmp.lt.s32.totalorder %s21, 3
      %p272 = pnand %p270, %p271
      %p273 = pneg %p272
      // Predicated region
      $region9: #{tpu_custom_call.1} parent=5 // pred_check
        _
      $region10: #{tpu_custom_call.1} parent=5 // pred_check_branch
        %275 = sbr.rel (%p272) target = $region12
      $region11: #{tpu_custom_call.1} parent=5 // pred_region
        %s276 = ssub.s32 %s21, 1
        // Predicated region
        $region13: #{tpu_custom_call.1} parent=11 // pred_check
          %p277 = pneg %p68
        $region14: #{tpu_custom_call.1} parent=11 // pred_check_branch
          %279 = sbr.rel (%p277) target = $region16
        $region15: #{tpu_custom_call.1} parent=11 // pred_region
          %s281 = ssub.s32 5120, 5120
          %282 = vsyncadd [#allocation7], %s281
          %s283 = sshll.u32 [#allocation6], 4
          %s284 = int_to_ptr.vmem [resolvable:$true] %s283
          %289 = dma.hbm_to_vmem [thread:$0]  %s1, 5120, %s284, [#allocation7], 64, 64, 4
        $region16: #{tpu_custom_call.1} parent=11 // pred_fallthru
          _
        // Predicated region
        $region17: #{tpu_custom_call.1} parent=11 // pred_check
          %p290 = pneg %p89
        $region18: #{tpu_custom_call.1} parent=11 // pred_check_branch
          %292 = sbr.rel (%p290) target = $region20
        $region19: #{tpu_custom_call.1} parent=11 // pred_region
          _
        $region20: #{tpu_custom_call.1} parent=11 // pred_fallthru
          _
        // Predicated region
        $region21: #{tpu_custom_call.1} parent=11 // pred_check
          %p293 = pneg %p110
        $region22: #{tpu_custom_call.1} parent=11 // pred_check_branch
          %295 = sbr.rel (%p293) target = $region24
        $region23: #{tpu_custom_call.1} parent=11 // pred_region
          _
        $region24: #{tpu_custom_call.1} parent=11 // pred_fallthru
          _
        // Predicated region
        $region25: #{tpu_custom_call.1} parent=11 // pred_check
          %p296 = pneg %p131
        $region26: #{tpu_custom_call.1} parent=11 // pred_check_branch
          %298 = sbr.rel (%p296) target = $region28
        $region27: #{tpu_custom_call.1} parent=11 // pred_region
          %s300 = ssub.s32 5120, 5120
          %301 = vsyncadd [#allocation7], %s300
          %s302 = sshll.u32 [#allocation8], 4
          %s303 = int_to_ptr.vmem [resolvable:$true] %s302
          %308 = dma.hbm_to_vmem [thread:$0]  %s4, 5120, %s303, [#allocation7], 64, 64, 4
        $region28: #{tpu_custom_call.1} parent=11 // pred_fallthru
          _
        // Predicated region
        $region29: #{tpu_custom_call.1} parent=11 // pred_check
          %p309 = pneg %p152
        $region30: #{tpu_custom_call.1} parent=11 // pred_check_branch
          %311 = sbr.rel (%p309) target = $region32
        $region31: #{tpu_custom_call.1} parent=11 // pred_region
          _
        $region32: #{tpu_custom_call.1} parent=11 // pred_fallthru
          _
        // Predicated region
        $region33: #{tpu_custom_call.1} parent=11 // pred_check
          %p312 = pneg %p173
        $region34: #{tpu_custom_call.1} parent=11 // pred_check_branch
          %314 = sbr.rel (%p312) target = $region36
        $region35: #{tpu_custom_call.1} parent=11 // pred_region
          _
        $region36: #{tpu_custom_call.1} parent=11 // pred_fallthru
          _
        // Predicated region
        $region37: #{tpu_custom_call.1} parent=11 // pred_check
          %p315 = pneg %p194
        $region38: #{tpu_custom_call.1} parent=11 // pred_check_branch
          %317 = sbr.rel (%p315) target = $region40
        $region39: #{tpu_custom_call.1} parent=11 // pred_region
          %s319 = ssub.s32 5120, 5120
          %320 = vsyncadd [#allocation10], %s319
          %s321 = sshll.u32 [#allocation9], 4
          %s322 = int_to_ptr.vmem [resolvable:$true] %s321
          %327 = dma.hbm_to_vmem [thread:$0]  %s7, 5120, %s322, [#allocation10], 64, 64, 4
        $region40: #{tpu_custom_call.1} parent=11 // pred_fallthru
          _
        // Predicated region
        $region41: #{tpu_custom_call.1} parent=11 // pred_check
          %p328 = pneg %p215
        $region42: #{tpu_custom_call.1} parent=11 // pred_check_branch
          %330 = sbr.rel (%p328) target = $region44
        $region43: #{tpu_custom_call.1} parent=11 // pred_region
          _
        $region44: #{tpu_custom_call.1} parent=11 // pred_fallthru
          _
        // Predicated region
        $region45: #{tpu_custom_call.1} parent=11 // pred_check
          %p331 = pneg %p236
        $region46: #{tpu_custom_call.1} parent=11 // pred_check_branch
          %333 = sbr.rel (%p331) target = $region48
        $region47: #{tpu_custom_call.1} parent=11 // pred_region
          _
        $region48: #{tpu_custom_call.1} parent=11 // pred_fallthru
          _
      $region12: #{tpu_custom_call.1} parent=5 // pred_fallthru
        _
      %p334 = scmp.lt.s32.totalorder %s21, 2
      // Predicated region
      $region49: #{tpu_custom_call.1} parent=5 // pred_check
        %p335 = pneg %p334
      $region50: #{tpu_custom_call.1} parent=5 // pred_check_branch
        %337 = sbr.rel (%p335) target = $region52
      $region51: #{tpu_custom_call.1} parent=5 // pred_region
        // Predicated region
        $region53: #{tpu_custom_call.1} parent=51 // pred_check
          %p338 = pneg %p41
        $region54: #{tpu_custom_call.1} parent=51 // pred_check_branch
          %340 = sbr.rel (%p338) target = $region56
        $region55: #{tpu_custom_call.1} parent=51 // pred_region
          %s341 = sand.u32 %s31, 1
          %s342 = scalar_lea.sflag [#allocation5], %s341
          %s343 = sand.u32 %s31, 1
          %s344 = smul.addr %s343, 16
          %s345 = scalar_lea.vmem [#allocation4], %s344
          %s347 = ssub.s32 256, 256
          %348 = vsyncadd %s342, %s347
          %s349 = smul.addr %s21, 2
          %s350 = smul.addr %s349, 128
          %s351 = scalar_lea.hbm %s0, %s350
          %s352 = sshll.u32 %s345, 4
          %s353 = int_to_ptr.vmem [resolvable:$true] %s352
          %358 = dma.hbm_to_vmem [thread:$0]  %s351, 256, %s353, %s342, 128, 128, 8
        $region56: #{tpu_custom_call.1} parent=51 // pred_fallthru
          _
      $region52: #{tpu_custom_call.1} parent=5 // pred_fallthru
        _
      %p359 = scmp.le.s32.totalorder 1, %s21
      %p360 = scmp.lt.s32.totalorder %s21, 3
      %p361 = pnand %p359, %p360
      %p362 = pneg %p361
      // Predicated region
      $region57: #{tpu_custom_call.1} parent=5 // pred_check
        _
      $region58: #{tpu_custom_call.1} parent=5 // pred_check_branch
        %364 = sbr.rel (%p361) target = $region60
      $region59: #{tpu_custom_call.1} parent=5 // pred_region
        %s365 = ssub.s32 %s21, 1
        %s366 = sand.u32 %s34, 1
        %s367 = scalar_lea.sflag [#allocation5], %s366
        %s368 = sand.u32 %s34, 1
        %s369 = smul.addr %s368, 16
        %s370 = scalar_lea.vmem [#allocation4], %s369
        // Predicated region
        $region61: #{tpu_custom_call.1} parent=59 // pred_check
          %p371 = pneg %p47
        $region62: #{tpu_custom_call.1} parent=59 // pred_check_branch
          %373 = sbr.rel (%p371) target = $region64
        $region63: #{tpu_custom_call.1} parent=59 // pred_region
          %374 = dma.done %s367, 256
        $region64: #{tpu_custom_call.1} parent=59 // pred_fallthru
          _
        // Predicated region
        $region65: #{tpu_custom_call.1} parent=59 // pred_check
          %p375 = pneg %p68
        $region66: #{tpu_custom_call.1} parent=59 // pred_check_branch
          %377 = sbr.rel (%p375) target = $region68
        $region67: #{tpu_custom_call.1} parent=59 // pred_region
          %378 = dma.done [#allocation7], 5120
        $region68: #{tpu_custom_call.1} parent=59 // pred_fallthru
          _
        // Predicated region
        $region69: #{tpu_custom_call.1} parent=59 // pred_check
          %p379 = pneg %p131
        $region70: #{tpu_custom_call.1} parent=59 // pred_check_branch
          %381 = sbr.rel (%p379) target = $region72
        $region71: #{tpu_custom_call.1} parent=59 // pred_region
          %382 = dma.done [#allocation7], 5120
        $region72: #{tpu_custom_call.1} parent=59 // pred_fallthru
          _
        // Predicated region
        $region73: #{tpu_custom_call.1} parent=59 // pred_check
          %p383 = pneg %p194
        $region74: #{tpu_custom_call.1} parent=59 // pred_check_branch
          %385 = sbr.rel (%p383) target = $region76
        $region75: #{tpu_custom_call.1} parent=59 // pred_region
          %386 = dma.done [#allocation10], 5120
        $region76: #{tpu_custom_call.1} parent=59 // pred_fallthru
          _
        %s387 = sand.u32 %s34, 1
        %s388 = scalar_lea.sflag [#allocation5], %s387
        %s389 = sand.u32 %s34, 1
        %s390 = smul.addr %s389, 16
        %s391 = scalar_lea.vmem [#allocation4], %s390
        %p392 = pneg %p47
        %p393 = pneg %p44
        %p394 = pneg %p68
        %p395 = pneg %p65
        %p396 = pneg %p89
        %p397 = pneg %p86
        %p398 = pneg %p110
        %p399 = pneg %p107
        %p400 = pneg %p131
        %p401 = pneg %p128
        %p402 = pneg %p152
        %p403 = pneg %p149
        %p404 = pneg %p173
        %p405 = pneg %p170
        %p406 = pneg %p194
        %p407 = pneg %p191
        %p408 = pneg %p215
        %p409 = pneg %p212
        %p410 = pneg %p236
        %p411 = pneg %p233
        %p412 = pneg %p262
        %p413 = pneg %p259
        %p414 = scmp.lt.s32.totalorder %s26, 1
        %s415 = scalar_select %p414, %s26, 1
        %s416 = smul.addr %s415, 2
        %s417 = smul.addr %s416, 8
        %s418 = scalar_lea.vmem %s10, %s417
        %p419 = scmp.lt.s32.totalorder %s26, 1
        %s420 = scalar_select %p419, %s26, 1
        %s421 = smul.addr %s420, 2
        %s422 = smul.addr %s421, 8
        %s423 = scalar_lea.vmem %s10, %s422
        %v425 = vld [vmem:[%s370] sm:$0xff]
        %v426 = vld [vmem:[%s370 + $0x8] sm:$0xff]
        %vm429 = vcmask 1046528
        %v430 = vrot.slane %v425, 1
        %v431 = vrot.slane %v426, 1
        %v432 = vsel %vm429, %v430, %v431
        %vm435 = vcmask 1045504
        %v436 = vrot.slane %v425, 2
        %v437 = vrot.slane %v426, 2
        %v438 = vsel %vm435, %v436, %v437
        %vm441 = vcmask 1044480
        %v442 = vrot.slane %v425, 3
        %v443 = vrot.slane %v426, 3
        %v444 = vsel %vm441, %v442, %v443
        %vm447 = vcmask 1043456
        %v448 = vrot.slane %v425, 4
        %v449 = vrot.slane %v426, 4
        %v450 = vsel %vm447, %v448, %v449
        %v453 = vpack.c.bf16 %v426, %v425
        %v454 = vpack.c.bf16 %v431, %v432
        %v455 = vpack.c.bf16 %v437, %v438
        %v456 = vpack.c.bf16 %v443, %v444
        %v457 = vpack.c.bf16 %v449, %v450
        %v458 = vld [vmem:[#allocation6] sm:$0xf]
        %v459 = vld [vmem:[#allocation6 + $0x4] sm:$0xf]
        %v460 = vld [vmem:[#allocation6 + $0x8] sm:$0xf]
        %v461 = vld [vmem:[#allocation6 + $0xc] sm:$0xf]
        %v462 = vld [vmem:[#allocation6 + $0x10] sm:$0xf]
        %v463 = vld [vmem:[#allocation6 + $0x14] sm:$0xf]
        %v464 = vld [vmem:[#allocation6 + $0x18] sm:$0xf]
        %v465 = vld [vmem:[#allocation6 + $0x1c] sm:$0xf]
        %v466 = vld [vmem:[#allocation6 + $0x20] sm:$0xf]
        %v467 = vld [vmem:[#allocation6 + $0x24] sm:$0xf]
        %v468 = vld [vmem:[#allocation6 + $0x28] sm:$0xf]
        %v469 = vld [vmem:[#allocation6 + $0x2c] sm:$0xf]
        %v470 = vld [vmem:[#allocation6 + $0x30] sm:$0xf]
        %v471 = vld [vmem:[#allocation6 + $0x34] sm:$0xf]
        %v472 = vld [vmem:[#allocation6 + $0x38] sm:$0xf]
        %v473 = vld [vmem:[#allocation6 + $0x3c] sm:$0xf]
        %v474 = vld [vmem:[#allocation6 + $0x40] sm:$0xf]
        %v475 = vld [vmem:[#allocation6 + $0x44] sm:$0xf]
        %v476 = vld [vmem:[#allocation6 + $0x48] sm:$0xf]
        %v477 = vld [vmem:[#allocation6 + $0x4c] sm:$0xf]
        %v478 = vld [vmem:[#allocation6 + $0x50] sm:$0xf]
        %v479 = vld [vmem:[#allocation6 + $0x54] sm:$0xf]
        %v480 = vld [vmem:[#allocation6 + $0x58] sm:$0xf]
        %v481 = vld [vmem:[#allocation6 + $0x5c] sm:$0xf]
        %v482 = vld [vmem:[#allocation6 + $0x60] sm:$0xf]
        %v483 = vld [vmem:[#allocation6 + $0x64] sm:$0xf]
        %v484 = vld [vmem:[#allocation6 + $0x68] sm:$0xf]
        %v485 = vld [vmem:[#allocation6 + $0x6c] sm:$0xf]
        %v486 = vld [vmem:[#allocation6 + $0x70] sm:$0xf]
        %v487 = vld [vmem:[#allocation6 + $0x74] sm:$0xf]
        %v488 = vld [vmem:[#allocation6 + $0x78] sm:$0xf]
        %v489 = vld [vmem:[#allocation6 + $0x7c] sm:$0xf]
        %v490 = vld [vmem:[#allocation6 + $0x80] sm:$0xf]
        %v491 = vld [vmem:[#allocation6 + $0x84] sm:$0xf]
        %v492 = vld [vmem:[#allocation6 + $0x88] sm:$0xf]
        %v493 = vld [vmem:[#allocation6 + $0x8c] sm:$0xf]
        %v494 = vld [vmem:[#allocation6 + $0x90] sm:$0xf]
        %v495 = vld [vmem:[#allocation6 + $0x94] sm:$0xf]
        %v496 = vld [vmem:[#allocation6 + $0x98] sm:$0xf]
        %v497 = vld [vmem:[#allocation6 + $0x9c] sm:$0xf]
        %v498 = vld [vmem:[#allocation6 + $0xa0] sm:$0xf]
        %v499 = vld [vmem:[#allocation6 + $0xa4] sm:$0xf]
        %v500 = vld [vmem:[#allocation6 + $0xa8] sm:$0xf]
        %v501 = vld [vmem:[#allocation6 + $0xac] sm:$0xf]
        %v502 = vld [vmem:[#allocation6 + $0xb0] sm:$0xf]
        %v503 = vld [vmem:[#allocation6 + $0xb4] sm:$0xf]
        %v504 = vld [vmem:[#allocation6 + $0xb8] sm:$0xf]
        %v505 = vld [vmem:[#allocation6 + $0xbc] sm:$0xf]
        %v506 = vld [vmem:[#allocation6 + $0xc0] sm:$0xf]
        %v507 = vld [vmem:[#allocation6 + $0xc4] sm:$0xf]
        %v508 = vld [vmem:[#allocation6 + $0xc8] sm:$0xf]
        %v509 = vld [vmem:[#allocation6 + $0xcc] sm:$0xf]
        %v510 = vld [vmem:[#allocation6 + $0xd0] sm:$0xf]
        %v511 = vld [vmem:[#allocation6 + $0xd4] sm:$0xf]
        %v512 = vld [vmem:[#allocation6 + $0xd8] sm:$0xf]
        %v513 = vld [vmem:[#allocation6 + $0xdc] sm:$0xf]
        %v514 = vld [vmem:[#allocation6 + $0xe0] sm:$0xf]
        %v515 = vld [vmem:[#allocation6 + $0xe4] sm:$0xf]
        %v516 = vld [vmem:[#allocation6 + $0xe8] sm:$0xf]
        %v517 = vld [vmem:[#allocation6 + $0xec] sm:$0xf]
        %v518 = vld [vmem:[#allocation6 + $0xf0] sm:$0xf]
        %v519 = vld [vmem:[#allocation6 + $0xf4] sm:$0xf]
        %v520 = vld [vmem:[#allocation6 + $0xf8] sm:$0xf]
        %v521 = vld [vmem:[#allocation6 + $0xfc] sm:$0xf]
        %v522 = vld [vmem:[#allocation6 + $0x100] sm:$0xf]
        %v523 = vld [vmem:[#allocation6 + $0x104] sm:$0xf]
        %v524 = vld [vmem:[#allocation6 + $0x108] sm:$0xf]
        %v525 = vld [vmem:[#allocation6 + $0x10c] sm:$0xf]
        %v526 = vld [vmem:[#allocation6 + $0x110] sm:$0xf]
        %v527 = vld [vmem:[#allocation6 + $0x114] sm:$0xf]
        %v528 = vld [vmem:[#allocation6 + $0x118] sm:$0xf]
        %v529 = vld [vmem:[#allocation6 + $0x11c] sm:$0xf]
        %v530 = vld [vmem:[#allocation6 + $0x120] sm:$0xf]
        %v531 = vld [vmem:[#allocation6 + $0x124] sm:$0xf]
        %v532 = vld [vmem:[#allocation6 + $0x128] sm:$0xf]
        %v533 = vld [vmem:[#allocation6 + $0x12c] sm:$0xf]
        %v534 = vld [vmem:[#allocation6 + $0x130] sm:$0xf]
        %v535 = vld [vmem:[#allocation6 + $0x134] sm:$0xf]
        %v536 = vld [vmem:[#allocation6 + $0x138] sm:$0xf]
        %v537 = vld [vmem:[#allocation6 + $0x13c] sm:$0xf]
        %v618 = vunpack.c.l.b16 %v458
        %v619 = vunpack.c.l.b16 %v459
        %v620 = vunpack.c.l.b16 %v460
        %v621 = vunpack.c.l.b16 %v461
        %v622 = vunpack.c.l.b16 %v462
        %v623 = vunpack.c.l.b16 %v463
        %v624 = vunpack.c.l.b16 %v464
        %v625 = vunpack.c.l.b16 %v465
        %v626 = vunpack.c.l.b16 %v466
        %v627 = vunpack.c.l.b16 %v467
        %v628 = vunpack.c.l.b16 %v468
        %v629 = vunpack.c.l.b16 %v469
        %v630 = vunpack.c.l.b16 %v470
        %v631 = vunpack.c.l.b16 %v471
        %v632 = vunpack.c.l.b16 %v472
        %v633 = vunpack.c.l.b16 %v473
        %v634 = vunpack.c.l.b16 %v474
        %v635 = vunpack.c.l.b16 %v475
        %v636 = vunpack.c.l.b16 %v476
        %v637 = vunpack.c.l.b16 %v477
        %v638 = vunpack.c.l.b16 %v478
        %v639 = vunpack.c.l.b16 %v479
        %v640 = vunpack.c.l.b16 %v480
        %v641 = vunpack.c.l.b16 %v481
        %v642 = vunpack.c.l.b16 %v482
        %v643 = vunpack.c.l.b16 %v483
        %v644 = vunpack.c.l.b16 %v484
        %v645 = vunpack.c.l.b16 %v485
        %v646 = vunpack.c.l.b16 %v486
        %v647 = vunpack.c.l.b16 %v487
        %v648 = vunpack.c.l.b16 %v488
        %v649 = vunpack.c.l.b16 %v489
        %v650 = vunpack.c.l.b16 %v490
        %v651 = vunpack.c.l.b16 %v491
        %v652 = vunpack.c.l.b16 %v492
        %v653 = vunpack.c.l.b16 %v493
        %v654 = vunpack.c.l.b16 %v494
        %v655 = vunpack.c.l.b16 %v495
        %v656 = vunpack.c.l.b16 %v496
        %v657 = vunpack.c.l.b16 %v497
        %v658 = vunpack.c.l.b16 %v498
        %v659 = vunpack.c.l.b16 %v499
        %v660 = vunpack.c.l.b16 %v500
        %v661 = vunpack.c.l.b16 %v501
        %v662 = vunpack.c.l.b16 %v502
        %v663 = vunpack.c.l.b16 %v503
        %v664 = vunpack.c.l.b16 %v504
        %v665 = vunpack.c.l.b16 %v505
        %v666 = vunpack.c.l.b16 %v506
        %v667 = vunpack.c.l.b16 %v507
        %v668 = vunpack.c.l.b16 %v508
        %v669 = vunpack.c.l.b16 %v509
        %v670 = vunpack.c.l.b16 %v510
        %v671 = vunpack.c.l.b16 %v511
        %v672 = vunpack.c.l.b16 %v512
        %v673 = vunpack.c.l.b16 %v513
        %v674 = vunpack.c.l.b16 %v514
        %v675 = vunpack.c.l.b16 %v515
        %v676 = vunpack.c.l.b16 %v516
        %v677 = vunpack.c.l.b16 %v517
        %v678 = vunpack.c.l.b16 %v518
        %v679 = vunpack.c.l.b16 %v519
        %v680 = vunpack.c.l.b16 %v520
        %v681 = vunpack.c.l.b16 %v521
        %v682 = vunpack.c.l.b16 %v522
        %v683 = vunpack.c.l.b16 %v523
        %v684 = vunpack.c.l.b16 %v524
        %v685 = vunpack.c.l.b16 %v525
        %v686 = vunpack.c.l.b16 %v526
        %v687 = vunpack.c.l.b16 %v527
        %v688 = vunpack.c.l.b16 %v528
        %v689 = vunpack.c.l.b16 %v529
        %v690 = vunpack.c.l.b16 %v530
        %v691 = vunpack.c.l.b16 %v531
        %v692 = vunpack.c.l.b16 %v532
        %v693 = vunpack.c.l.b16 %v533
        %v694 = vunpack.c.l.b16 %v534
        %v695 = vunpack.c.l.b16 %v535
        %v696 = vunpack.c.l.b16 %v536
        %v697 = vunpack.c.l.b16 %v537
        %v698 = vpack.c.b16 %v619, %v618
        %v699 = vpack.c.b16 %v621, %v620
        %v700 = vpack.c.b16 %v623, %v622
        %v701 = vpack.c.b16 %v625, %v624
        %v702 = vpack.c.b16 %v627, %v626
        %v703 = vpack.c.b16 %v629, %v628
        %v704 = vpack.c.b16 %v631, %v630
        %v705 = vpack.c.b16 %v633, %v632
        %v706 = vpack.c.b16 %v635, %v634
        %v707 = vpack.c.b16 %v637, %v636
        %v708 = vpack.c.b16 %v639, %v638
        %v709 = vpack.c.b16 %v641, %v640
        %v710 = vpack.c.b16 %v643, %v642
        %v711 = vpack.c.b16 %v645, %v644
        %v712 = vpack.c.b16 %v647, %v646
        %v713 = vpack.c.b16 %v649, %v648
        %v714 = vpack.c.b16 %v651, %v650
        %v715 = vpack.c.b16 %v653, %v652
        %v716 = vpack.c.b16 %v655, %v654
        %v717 = vpack.c.b16 %v657, %v656
        %v718 = vpack.c.b16 %v659, %v658
        %v719 = vpack.c.b16 %v661, %v660
        %v720 = vpack.c.b16 %v663, %v662
        %v721 = vpack.c.b16 %v665, %v664
        %v722 = vpack.c.b16 %v667, %v666
        %v723 = vpack.c.b16 %v669, %v668
        %v724 = vpack.c.b16 %v671, %v670
        %v725 = vpack.c.b16 %v673, %v672
        %v726 = vpack.c.b16 %v675, %v674
        %v727 = vpack.c.b16 %v677, %v676
        %v728 = vpack.c.b16 %v679, %v678
        %v729 = vpack.c.b16 %v681, %v680
        %v730 = vpack.c.b16 %v683, %v682
        %v731 = vpack.c.b16 %v685, %v684
        %v732 = vpack.c.b16 %v687, %v686
        %v733 = vpack.c.b16 %v689, %v688
        %v734 = vpack.c.b16 %v691, %v690
        %v735 = vpack.c.b16 %v693, %v692
        %v736 = vpack.c.b16 %v695, %v694
        %v737 = vpack.c.b16 %v697, %v696
        %778 = vmatprep.subr.bf16.mxu0 0
        %779 = vmatpush1.bf16.msra.mxu0 %v705
        %780 = vmatprep.subr.bf16.mxu0 0
        %781 = vmatpush1.bf16.msra.mxu0 %v704
        %782 = vmatprep.subr.bf16.mxu0 0
        %783 = vmatpush1.bf16.msra.mxu0 %v703
        %784 = vmatprep.subr.bf16.mxu0 0
        %785 = vmatpush1.bf16.msra.mxu0 %v702
        %786 = vmatprep.subr.bf16.mxu0 0
        %787 = vmatpush1.bf16.msra.mxu0 %v701
        %788 = vmatprep.subr.bf16.mxu0 0
        %789 = vmatpush1.bf16.msra.mxu0 %v700
        %790 = vmatprep.subr.bf16.mxu0 0
        %791 = vmatpush1.bf16.msra.mxu0 %v699
        %792 = vmatprep.subr.bf16.mxu0 0
        %793 = vmatpush1.bf16.msra.mxu0 %v698
        %794 = vmatprep.subr.bf16.mxu0 0
        %795 = vmatpush2.bf16.msra.mxu0 %v713
        %796 = vmatprep.subr.bf16.mxu0 0
        %797 = vmatpush2.bf16.msra.mxu0 %v712
        %798 = vmatprep.subr.bf16.mxu0 0
        %799 = vmatpush2.bf16.msra.mxu0 %v711
        %800 = vmatprep.subr.bf16.mxu0 0
        %801 = vmatpush2.bf16.msra.mxu0 %v710
        %802 = vmatprep.subr.bf16.mxu0 0
        %803 = vmatpush2.bf16.msra.mxu0 %v709
        %804 = vmatprep.subr.bf16.mxu0 0
        %805 = vmatpush2.bf16.msra.mxu0 %v708
        %806 = vmatprep.subr.bf16.mxu0 0
        %807 = vmatpush2.bf16.msra.mxu0 %v707
        %808 = vmatprep.subr.bf16.mxu0 0
        %809 = vmatpush2.bf16.msra.mxu0 %v706
        %810 = vmatprep.mubr.bf16.mxu0 %v454
        %811 = vmatmul.mubr.bf16.gmra.mxu0 %v453
        %v812 = vpop.f32.mrf.mxu0
        %v813 = vadd.f32 0.0, %v812
        %v814 = vpop.f32.mrf.mxu0
        %v815 = vpop.f32.mrf.mxu0
        %v816 = vadd.f32 0.0, %v815
        %v817 = vpop.f32.mrf.mxu0
        %818 = vdwg.mxu0
        %819 = vmatprep.subr.bf16.mxu0 0
        %820 = vmatpush1.bf16.msra.mxu0 %v721
        %821 = vmatprep.subr.bf16.mxu0 0
        %822 = vmatpush1.bf16.msra.mxu0 %v720
        %823 = vmatprep.subr.bf16.mxu0 0
        %824 = vmatpush1.bf16.msra.mxu0 %v719
        %825 = vmatprep.subr.bf16.mxu0 0
        %826 = vmatpush1.bf16.msra.mxu0 %v718
        %827 = vmatprep.subr.bf16.mxu0 0
        %828 = vmatpush1.bf16.msra.mxu0 %v717
        %829 = vmatprep.subr.bf16.mxu0 0
        %830 = vmatpush1.bf16.msra.mxu0 %v716
        %831 = vmatprep.subr.bf16.mxu0 0
        %832 = vmatpush1.bf16.msra.mxu0 %v715
        %833 = vmatprep.subr.bf16.mxu0 0
        %834 = vmatpush1.bf16.msra.mxu0 %v714
        %835 = vmatprep.subr.bf16.mxu0 0
        %836 = vmatpush2.bf16.msra.mxu0 %v729
        %837 = vmatprep.subr.bf16.mxu0 0
        %838 = vmatpush2.bf16.msra.mxu0 %v728
        %839 = vmatprep.subr.bf16.mxu0 0
        %840 = vmatpush2.bf16.msra.mxu0 %v727
        %841 = vmatprep.subr.bf16.mxu0 0
        %842 = vmatpush2.bf16.msra.mxu0 %v726
        %843 = vmatprep.subr.bf16.mxu0 0
        %844 = vmatpush2.bf16.msra.mxu0 %v725
        %845 = vmatprep.subr.bf16.mxu0 0
        %846 = vmatpush2.bf16.msra.mxu0 %v724
        %847 = vmatprep.subr.bf16.mxu0 0
        %848 = vmatpush2.bf16.msra.mxu0 %v723
        %849 = vmatprep.subr.bf16.mxu0 0
        %850 = vmatpush2.bf16.msra.mxu0 %v722
        %851 = vmatprep.mubr.bf16.mxu0 %v456
        %852 = vmatmul.mubr.bf16.gmra.mxu0 %v455
        %v853 = vpop.f32.mrf.mxu0
        %v854 = vadd.f32 %v813, %v853
        %v855 = vpop.f32.mrf.mxu0
        %v856 = vpop.f32.mrf.mxu0
        %v857 = vadd.f32 %v816, %v856
        %v858 = vpop.f32.mrf.mxu0
        %859 = vdwg.mxu0
        %860 = vmatprep.subr.bf16.mxu0 0
        %861 = vmatpush1.bf16.msra.mxu0 %v737
        %862 = vmatprep.subr.bf16.mxu0 0
        %863 = vmatpush1.bf16.msra.mxu0 %v736
        %864 = vmatprep.subr.bf16.mxu0 0
        %865 = vmatpush1.bf16.msra.mxu0 %v735
        %866 = vmatprep.subr.bf16.mxu0 0
        %867 = vmatpush1.bf16.msra.mxu0 %v734
        %868 = vmatprep.subr.bf16.mxu0 0
        %869 = vmatpush1.bf16.msra.mxu0 %v733
        %870 = vmatprep.subr.bf16.mxu0 0
        %871 = vmatpush1.bf16.msra.mxu0 %v732
        %872 = vmatprep.subr.bf16.mxu0 0
        %873 = vmatpush1.bf16.msra.mxu0 %v731
        %874 = vmatprep.subr.bf16.mxu0 0
        %875 = vmatpush1.bf16.msra.mxu0 %v730
        %876 = vmatprep.subr.bf16.mxu0 0
        %877 = vmatpush2.bf16.msra.mxu0 0
        %878 = vmatprep.subr.bf16.mxu0 0
        %879 = vmatpush2.bf16.msra.mxu0 0
        %880 = vmatprep.subr.bf16.mxu0 0
        %881 = vmatpush2.bf16.msra.mxu0 0
        %882 = vmatprep.subr.bf16.mxu0 0
        %883 = vmatpush2.bf16.msra.mxu0 0
        %884 = vmatprep.subr.bf16.mxu0 0
        %885 = vmatpush2.bf16.msra.mxu0 0
        %886 = vmatprep.subr.bf16.mxu0 0
        %887 = vmatpush2.bf16.msra.mxu0 0
        %888 = vmatprep.subr.bf16.mxu0 0
        %889 = vmatpush2.bf16.msra.mxu0 0
        %890 = vmatprep.subr.bf16.mxu0 0
        %891 = vmatpush2.bf16.msra.mxu0 0
        %892 = vmatprep.mubr.bf16.mxu0 0
        %893 = vmatmul.mubr.bf16.gmra.mxu0 %v457
        %v894 = vpop.f32.mrf.mxu0
        %v895 = vadd.f32 %v854, %v894
        %v896 = vpop.f32.mrf.mxu0
        %v897 = vpop.f32.mrf.mxu0
        %v898 = vadd.f32 %v857, %v897
        %v899 = vpop.f32.mrf.mxu0
        %900 = vdwg.mxu0
        %v901 = vld [vmem:[%s2] sm:$0x1]
        %v903 = vlaneseq
        %v904 = vshrl.u32 %v903, 7
        %v905 = vsub.s32 0, %v904
        %v906 = vrot.slane %v901, %v905
        %v908 = vmul.f32 %v895, %v906
        %v909 = vmul.f32 %v898, %v906
        %v910 = vld [vmem:[%s3] sm:$0x1]
        %v912 = vlaneseq
        %v913 = vshrl.u32 %v912, 7
        %v914 = vsub.s32 0, %v913
        %v915 = vrot.slane %v910, %v914
        %v917 = vadd.f32 %v908, %v915
        %v918 = vadd.f32 %v909, %v915
        %v919 = vmax.f32 %v917, 0.0
        %v920 = vmax.f32 %v918, 0.0
        %921 = vst [vmem:[#allocation2] sm:$0xff] 0.0
        %922 = vst [vmem:[#allocation2 + $0x8] sm:$0xff] 0.0
        %923 = vst [vmem:[#allocation2 + $0x2] sm:$0xff] %v919
        %924 = vst [vmem:[#allocation2 + $0xa] sm:$0xf] %v920
        %v925 = vld [vmem:[#allocation2] sm:$0xff]
        %v926 = vld [vmem:[#allocation2 + $0x8] sm:$0xff]
        %v929 = vrot.slane %v925, 1
        %v930 = vrot.slane %v926, 1
        %v931 = vsel %vm429, %v929, %v930
        %v934 = vrot.slane %v925, 2
        %v935 = vrot.slane %v926, 2
        %v936 = vsel %vm435, %v934, %v935
        %v939 = vrot.slane %v925, 3
        %v940 = vrot.slane %v926, 3
        %v941 = vsel %vm441, %v939, %v940
        %v944 = vrot.slane %v925, 4
        %v945 = vrot.slane %v926, 4
        %v946 = vsel %vm447, %v944, %v945
        %v949 = vpack.c.bf16 %v926, %v925
        %v950 = vpack.c.bf16 %v930, %v931
        %v951 = vpack.c.bf16 %v935, %v936
        %v952 = vpack.c.bf16 %v940, %v941
        %v953 = vpack.c.bf16 %v945, %v946
        %v954 = vld [vmem:[#allocation8] sm:$0xf]
        %v955 = vld [vmem:[#allocation8 + $0x4] sm:$0xf]
        %v956 = vld [vmem:[#allocation8 + $0x8] sm:$0xf]
        %v957 = vld [vmem:[#allocation8 + $0xc] sm:$0xf]
        %v958 = vld [vmem:[#allocation8 + $0x10] sm:$0xf]
        %v959 = vld [vmem:[#allocation8 + $0x14] sm:$0xf]
        %v960 = vld [vmem:[#allocation8 + $0x18] sm:$0xf]
        %v961 = vld [vmem:[#allocation8 + $0x1c] sm:$0xf]
        %v962 = vld [vmem:[#allocation8 + $0x20] sm:$0xf]
        %v963 = vld [vmem:[#allocation8 + $0x24] sm:$0xf]
        %v964 = vld [vmem:[#allocation8 + $0x28] sm:$0xf]
        %v965 = vld [vmem:[#allocation8 + $0x2c] sm:$0xf]
        %v966 = vld [vmem:[#allocation8 + $0x30] sm:$0xf]
        %v967 = vld [vmem:[#allocation8 + $0x34] sm:$0xf]
        %v968 = vld [vmem:[#allocation8 + $0x38] sm:$0xf]
        %v969 = vld [vmem:[#allocation8 + $0x3c] sm:$0xf]
        %v970 = vld [vmem:[#allocation8 + $0x40] sm:$0xf]
        %v971 = vld [vmem:[#allocation8 + $0x44] sm:$0xf]
        %v972 = vld [vmem:[#allocation8 + $0x48] sm:$0xf]
        %v973 = vld [vmem:[#allocation8 + $0x4c] sm:$0xf]
        %v974 = vld [vmem:[#allocation8 + $0x50] sm:$0xf]
        %v975 = vld [vmem:[#allocation8 + $0x54] sm:$0xf]
        %v976 = vld [vmem:[#allocation8 + $0x58] sm:$0xf]
        %v977 = vld [vmem:[#allocation8 + $0x5c] sm:$0xf]
        %v978 = vld [vmem:[#allocation8 + $0x60] sm:$0xf]
        %v979 = vld [vmem:[#allocation8 + $0x64] sm:$0xf]
        %v980 = vld [vmem:[#allocation8 + $0x68] sm:$0xf]
        %v981 = vld [vmem:[#allocation8 + $0x6c] sm:$0xf]
        %v982 = vld [vmem:[#allocation8 + $0x70] sm:$0xf]
        %v983 = vld [vmem:[#allocation8 + $0x74] sm:$0xf]
        %v984 = vld [vmem:[#allocation8 + $0x78] sm:$0xf]
        %v985 = vld [vmem:[#allocation8 + $0x7c] sm:$0xf]
        %v986 = vld [vmem:[#allocation8 + $0x80] sm:$0xf]
        %v987 = vld [vmem:[#allocation8 + $0x84] sm:$0xf]
        %v988 = vld [vmem:[#allocation8 + $0x88] sm:$0xf]
        %v989 = vld [vmem:[#allocation8 + $0x8c] sm:$0xf]
        %v990 = vld [vmem:[#allocation8 + $0x90] sm:$0xf]
        %v991 = vld [vmem:[#allocation8 + $0x94] sm:$0xf]
        %v992 = vld [vmem:[#allocation8 + $0x98] sm:$0xf]
        %v993 = vld [vmem:[#allocation8 + $0x9c] sm:$0xf]
        %v994 = vld [vmem:[#allocation8 + $0xa0] sm:$0xf]
        %v995 = vld [vmem:[#allocation8 + $0xa4] sm:$0xf]
        %v996 = vld [vmem:[#allocation8 + $0xa8] sm:$0xf]
        %v997 = vld [vmem:[#allocation8 + $0xac] sm:$0xf]
        %v998 = vld [vmem:[#allocation8 + $0xb0] sm:$0xf]
        %v999 = vld [vmem:[#allocation8 + $0xb4] sm:$0xf]
        %v1000 = vld [vmem:[#allocation8 + $0xb8] sm:$0xf]
        %v1001 = vld [vmem:[#allocation8 + $0xbc] sm:$0xf]
        %v1002 = vld [vmem:[#allocation8 + $0xc0] sm:$0xf]
        %v1003 = vld [vmem:[#allocation8 + $0xc4] sm:$0xf]
        %v1004 = vld [vmem:[#allocation8 + $0xc8] sm:$0xf]
        %v1005 = vld [vmem:[#allocation8 + $0xcc] sm:$0xf]
        %v1006 = vld [vmem:[#allocation8 + $0xd0] sm:$0xf]
        %v1007 = vld [vmem:[#allocation8 + $0xd4] sm:$0xf]
        %v1008 = vld [vmem:[#allocation8 + $0xd8] sm:$0xf]
        %v1009 = vld [vmem:[#allocation8 + $0xdc] sm:$0xf]
        %v1010 = vld [vmem:[#allocation8 + $0xe0] sm:$0xf]
        %v1011 = vld [vmem:[#allocation8 + $0xe4] sm:$0xf]
        %v1012 = vld [vmem:[#allocation8 + $0xe8] sm:$0xf]
        %v1013 = vld [vmem:[#allocation8 + $0xec] sm:$0xf]
        %v1014 = vld [vmem:[#allocation8 + $0xf0] sm:$0xf]
        %v1015 = vld [vmem:[#allocation8 + $0xf4] sm:$0xf]
        %v1016 = vld [vmem:[#allocation8 + $0xf8] sm:$0xf]
        %v1017 = vld [vmem:[#allocation8 + $0xfc] sm:$0xf]
        %v1018 = vld [vmem:[#allocation8 + $0x100] sm:$0xf]
        %v1019 = vld [vmem:[#allocation8 + $0x104] sm:$0xf]
        %v1020 = vld [vmem:[#allocation8 + $0x108] sm:$0xf]
        %v1021 = vld [vmem:[#allocation8 + $0x10c] sm:$0xf]
        %v1022 = vld [vmem:[#allocation8 + $0x110] sm:$0xf]
        %v1023 = vld [vmem:[#allocation8 + $0x114] sm:$0xf]
        %v1024 = vld [vmem:[#allocation8 + $0x118] sm:$0xf]
        %v1025 = vld [vmem:[#allocation8 + $0x11c] sm:$0xf]
        %v1026 = vld [vmem:[#allocation8 + $0x120] sm:$0xf]
        %v1027 = vld [vmem:[#allocation8 + $0x124] sm:$0xf]
        %v1028 = vld [vmem:[#allocation8 + $0x128] sm:$0xf]
        %v1029 = vld [vmem:[#allocation8 + $0x12c] sm:$0xf]
        %v1030 = vld [vmem:[#allocation8 + $0x130] sm:$0xf]
        %v1031 = vld [vmem:[#allocation8 + $0x134] sm:$0xf]
        %v1032 = vld [vmem:[#allocation8 + $0x138] sm:$0xf]
        %v1033 = vld [vmem:[#allocation8 + $0x13c] sm:$0xf]
        %v1114 = vunpack.c.l.b16 %v954
        %v1115 = vunpack.c.l.b16 %v955
        %v1116 = vunpack.c.l.b16 %v956
        %v1117 = vunpack.c.l.b16 %v957
        %v1118 = vunpack.c.l.b16 %v958
        %v1119 = vunpack.c.l.b16 %v959
        %v1120 = vunpack.c.l.b16 %v960
        %v1121 = vunpack.c.l.b16 %v961
        %v1122 = vunpack.c.l.b16 %v962
        %v1123 = vunpack.c.l.b16 %v963
        %v1124 = vunpack.c.l.b16 %v964
        %v1125 = vunpack.c.l.b16 %v965
        %v1126 = vunpack.c.l.b16 %v966
        %v1127 = vunpack.c.l.b16 %v967
        %v1128 = vunpack.c.l.b16 %v968
        %v1129 = vunpack.c.l.b16 %v969
        %v1130 = vunpack.c.l.b16 %v970
        %v1131 = vunpack.c.l.b16 %v971
        %v1132 = vunpack.c.l.b16 %v972
        %v1133 = vunpack.c.l.b16 %v973
        %v1134 = vunpack.c.l.b16 %v974
        %v1135 = vunpack.c.l.b16 %v975
        %v1136 = vunpack.c.l.b16 %v976
        %v1137 = vunpack.c.l.b16 %v977
        %v1138 = vunpack.c.l.b16 %v978
        %v1139 = vunpack.c.l.b16 %v979
        %v1140 = vunpack.c.l.b16 %v980
        %v1141 = vunpack.c.l.b16 %v981
        %v1142 = vunpack.c.l.b16 %v982
        %v1143 = vunpack.c.l.b16 %v983
        %v1144 = vunpack.c.l.b16 %v984
        %v1145 = vunpack.c.l.b16 %v985
        %v1146 = vunpack.c.l.b16 %v986
        %v1147 = vunpack.c.l.b16 %v987
        %v1148 = vunpack.c.l.b16 %v988
        %v1149 = vunpack.c.l.b16 %v989
        %v1150 = vunpack.c.l.b16 %v990
        %v1151 = vunpack.c.l.b16 %v991
        %v1152 = vunpack.c.l.b16 %v992
        %v1153 = vunpack.c.l.b16 %v993
        %v1154 = vunpack.c.l.b16 %v994
        %v1155 = vunpack.c.l.b16 %v995
        %v1156 = vunpack.c.l.b16 %v996
        %v1157 = vunpack.c.l.b16 %v997
        %v1158 = vunpack.c.l.b16 %v998
        %v1159 = vunpack.c.l.b16 %v999
        %v1160 = vunpack.c.l.b16 %v1000
        %v1161 = vunpack.c.l.b16 %v1001
        %v1162 = vunpack.c.l.b16 %v1002
        %v1163 = vunpack.c.l.b16 %v1003
        %v1164 = vunpack.c.l.b16 %v1004
        %v1165 = vunpack.c.l.b16 %v1005
        %v1166 = vunpack.c.l.b16 %v1006
        %v1167 = vunpack.c.l.b16 %v1007
        %v1168 = vunpack.c.l.b16 %v1008
        %v1169 = vunpack.c.l.b16 %v1009
        %v1170 = vunpack.c.l.b16 %v1010
        %v1171 = vunpack.c.l.b16 %v1011
        %v1172 = vunpack.c.l.b16 %v1012
        %v1173 = vunpack.c.l.b16 %v1013
        %v1174 = vunpack.c.l.b16 %v1014
        %v1175 = vunpack.c.l.b16 %v1015
        %v1176 = vunpack.c.l.b16 %v1016
        %v1177 = vunpack.c.l.b16 %v1017
        %v1178 = vunpack.c.l.b16 %v1018
        %v1179 = vunpack.c.l.b16 %v1019
        %v1180 = vunpack.c.l.b16 %v1020
        %v1181 = vunpack.c.l.b16 %v1021
        %v1182 = vunpack.c.l.b16 %v1022
        %v1183 = vunpack.c.l.b16 %v1023
        %v1184 = vunpack.c.l.b16 %v1024
        %v1185 = vunpack.c.l.b16 %v1025
        %v1186 = vunpack.c.l.b16 %v1026
        %v1187 = vunpack.c.l.b16 %v1027
        %v1188 = vunpack.c.l.b16 %v1028
        %v1189 = vunpack.c.l.b16 %v1029
        %v1190 = vunpack.c.l.b16 %v1030
        %v1191 = vunpack.c.l.b16 %v1031
        %v1192 = vunpack.c.l.b16 %v1032
        %v1193 = vunpack.c.l.b16 %v1033
        %v1194 = vpack.c.b16 %v1115, %v1114
        %v1195 = vpack.c.b16 %v1117, %v1116
        %v1196 = vpack.c.b16 %v1119, %v1118
        %v1197 = vpack.c.b16 %v1121, %v1120
        %v1198 = vpack.c.b16 %v1123, %v1122
        %v1199 = vpack.c.b16 %v1125, %v1124
        %v1200 = vpack.c.b16 %v1127, %v1126
        %v1201 = vpack.c.b16 %v1129, %v1128
        %v1202 = vpack.c.b16 %v1131, %v1130
        %v1203 = vpack.c.b16 %v1133, %v1132
        %v1204 = vpack.c.b16 %v1135, %v1134
        %v1205 = vpack.c.b16 %v1137, %v1136
        %v1206 = vpack.c.b16 %v1139, %v1138
        %v1207 = vpack.c.b16 %v1141, %v1140
        %v1208 = vpack.c.b16 %v1143, %v1142
        %v1209 = vpack.c.b16 %v1145, %v1144
        %v1210 = vpack.c.b16 %v1147, %v1146
        %v1211 = vpack.c.b16 %v1149, %v1148
        %v1212 = vpack.c.b16 %v1151, %v1150
        %v1213 = vpack.c.b16 %v1153, %v1152
        %v1214 = vpack.c.b16 %v1155, %v1154
        %v1215 = vpack.c.b16 %v1157, %v1156
        %v1216 = vpack.c.b16 %v1159, %v1158
        %v1217 = vpack.c.b16 %v1161, %v1160
        %v1218 = vpack.c.b16 %v1163, %v1162
        %v1219 = vpack.c.b16 %v1165, %v1164
        %v1220 = vpack.c.b16 %v1167, %v1166
        %v1221 = vpack.c.b16 %v1169, %v1168
        %v1222 = vpack.c.b16 %v1171, %v1170
        %v1223 = vpack.c.b16 %v1173, %v1172
        %v1224 = vpack.c.b16 %v1175, %v1174
        %v1225 = vpack.c.b16 %v1177, %v1176
        %v1226 = vpack.c.b16 %v1179, %v1178
        %v1227 = vpack.c.b16 %v1181, %v1180
        %v1228 = vpack.c.b16 %v1183, %v1182
        %v1229 = vpack.c.b16 %v1185, %v1184
        %v1230 = vpack.c.b16 %v1187, %v1186
        %v1231 = vpack.c.b16 %v1189, %v1188
        %v1232 = vpack.c.b16 %v1191, %v1190
        %v1233 = vpack.c.b16 %v1193, %v1192
        %1274 = vmatprep.subr.bf16.mxu0 0
        %1275 = vmatpush1.bf16.msra.mxu0 %v1201
        %1276 = vmatprep.subr.bf16.mxu0 0
        %1277 = vmatpush1.bf16.msra.mxu0 %v1200
        %1278 = vmatprep.subr.bf16.mxu0 0
        %1279 = vmatpush1.bf16.msra.mxu0 %v1199
        %1280 = vmatprep.subr.bf16.mxu0 0
        %1281 = vmatpush1.bf16.msra.mxu0 %v1198
        %1282 = vmatprep.subr.bf16.mxu0 0
        %1283 = vmatpush1.bf16.msra.mxu0 %v1197
        %1284 = vmatprep.subr.bf16.mxu0 0
        %1285 = vmatpush1.bf16.msra.mxu0 %v1196
        %1286 = vmatprep.subr.bf16.mxu0 0
        %1287 = vmatpush1.bf16.msra.mxu0 %v1195
        %1288 = vmatprep.subr.bf16.mxu0 0
        %1289 = vmatpush1.bf16.msra.mxu0 %v1194
        %1290 = vmatprep.subr.bf16.mxu0 0
        %1291 = vmatpush2.bf16.msra.mxu0 %v1209
        %1292 = vmatprep.subr.bf16.mxu0 0
        %1293 = vmatpush2.bf16.msra.mxu0 %v1208
        %1294 = vmatprep.subr.bf16.mxu0 0
        %1295 = vmatpush2.bf16.msra.mxu0 %v1207
        %1296 = vmatprep.subr.bf16.mxu0 0
        %1297 = vmatpush2.bf16.msra.mxu0 %v1206
        %1298 = vmatprep.subr.bf16.mxu0 0
        %1299 = vmatpush2.bf16.msra.mxu0 %v1205
        %1300 = vmatprep.subr.bf16.mxu0 0
        %1301 = vmatpush2.bf16.msra.mxu0 %v1204
        %1302 = vmatprep.subr.bf16.mxu0 0
        %1303 = vmatpush2.bf16.msra.mxu0 %v1203
        %1304 = vmatprep.subr.bf16.mxu0 0
        %1305 = vmatpush2.bf16.msra.mxu0 %v1202
        %1306 = vmatprep.mubr.bf16.mxu0 %v950
        %1307 = vmatmul.mubr.bf16.gmra.mxu0 %v949
        %v1308 = vpop.f32.mrf.mxu0
        %v1309 = vadd.f32 0.0, %v1308
        %v1310 = vpop.f32.mrf.mxu0
        %v1311 = vpop.f32.mrf.mxu0
        %v1312 = vadd.f32 0.0, %v1311
        %v1313 = vpop.f32.mrf.mxu0
        %1314 = vdwg.mxu0
        %1315 = vmatprep.subr.bf16.mxu0 0
        %1316 = vmatpush1.bf16.msra.mxu0 %v1217
        %1317 = vmatprep.subr.bf16.mxu0 0
        %1318 = vmatpush1.bf16.msra.mxu0 %v1216
        %1319 = vmatprep.subr.bf16.mxu0 0
        %1320 = vmatpush1.bf16.msra.mxu0 %v1215
        %1321 = vmatprep.subr.bf16.mxu0 0
        %1322 = vmatpush1.bf16.msra.mxu0 %v1214
        %1323 = vmatprep.subr.bf16.mxu0 0
        %1324 = vmatpush1.bf16.msra.mxu0 %v1213
        %1325 = vmatprep.subr.bf16.mxu0 0
        %1326 = vmatpush1.bf16.msra.mxu0 %v1212
        %1327 = vmatprep.subr.bf16.mxu0 0
        %1328 = vmatpush1.bf16.msra.mxu0 %v1211
        %1329 = vmatprep.subr.bf16.mxu0 0
        %1330 = vmatpush1.bf16.msra.mxu0 %v1210
        %1331 = vmatprep.subr.bf16.mxu0 0
        %1332 = vmatpush2.bf16.msra.mxu0 %v1225
        %1333 = vmatprep.subr.bf16.mxu0 0
        %1334 = vmatpush2.bf16.msra.mxu0 %v1224
        %1335 = vmatprep.subr.bf16.mxu0 0
        %1336 = vmatpush2.bf16.msra.mxu0 %v1223
        %1337 = vmatprep.subr.bf16.mxu0 0
        %1338 = vmatpush2.bf16.msra.mxu0 %v1222
        %1339 = vmatprep.subr.bf16.mxu0 0
        %1340 = vmatpush2.bf16.msra.mxu0 %v1221
        %1341 = vmatprep.subr.bf16.mxu0 0
        %1342 = vmatpush2.bf16.msra.mxu0 %v1220
        %1343 = vmatprep.subr.bf16.mxu0 0
        %1344 = vmatpush2.bf16.msra.mxu0 %v1219
        %1345 = vmatprep.subr.bf16.mxu0 0
        %1346 = vmatpush2.bf16.msra.mxu0 %v1218
        %1347 = vmatprep.mubr.bf16.mxu0 %v952
        %1348 = vmatmul.mubr.bf16.gmra.mxu0 %v951
        %v1349 = vpop.f32.mrf.mxu0
        %v1350 = vadd.f32 %v1309, %v1349
        %v1351 = vpop.f32.mrf.mxu0
        %v1352 = vpop.f32.mrf.mxu0
        %v1353 = vadd.f32 %v1312, %v1352
        %v1354 = vpop.f32.mrf.mxu0
        %1355 = vdwg.mxu0
        %1356 = vmatprep.subr.bf16.mxu0 0
        %1357 = vmatpush1.bf16.msra.mxu0 %v1233
        %1358 = vmatprep.subr.bf16.mxu0 0
        %1359 = vmatpush1.bf16.msra.mxu0 %v1232
        %1360 = vmatprep.subr.bf16.mxu0 0
        %1361 = vmatpush1.bf16.msra.mxu0 %v1231
        %1362 = vmatprep.subr.bf16.mxu0 0
        %1363 = vmatpush1.bf16.msra.mxu0 %v1230
        %1364 = vmatprep.subr.bf16.mxu0 0
        %1365 = vmatpush1.bf16.msra.mxu0 %v1229
        %1366 = vmatprep.subr.bf16.mxu0 0
        %1367 = vmatpush1.bf16.msra.mxu0 %v1228
        %1368 = vmatprep.subr.bf16.mxu0 0
        %1369 = vmatpush1.bf16.msra.mxu0 %v1227
        %1370 = vmatprep.subr.bf16.mxu0 0
        %1371 = vmatpush1.bf16.msra.mxu0 %v1226
        %1372 = vmatprep.subr.bf16.mxu0 0
        %1373 = vmatpush2.bf16.msra.mxu0 0
        %1374 = vmatprep.subr.bf16.mxu0 0
        %1375 = vmatpush2.bf16.msra.mxu0 0
        %1376 = vmatprep.subr.bf16.mxu0 0
        %1377 = vmatpush2.bf16.msra.mxu0 0
        %1378 = vmatprep.subr.bf16.mxu0 0
        %1379 = vmatpush2.bf16.msra.mxu0 0
        %1380 = vmatprep.subr.bf16.mxu0 0
        %1381 = vmatpush2.bf16.msra.mxu0 0
        %1382 = vmatprep.subr.bf16.mxu0 0
        %1383 = vmatpush2.bf16.msra.mxu0 0
        %1384 = vmatprep.subr.bf16.mxu0 0
        %1385 = vmatpush2.bf16.msra.mxu0 0
        %1386 = vmatprep.subr.bf16.mxu0 0
        %1387 = vmatpush2.bf16.msra.mxu0 0
        %1388 = vmatprep.mubr.bf16.mxu0 0
        %1389 = vmatmul.mubr.bf16.gmra.mxu0 %v953
        %v1390 = vpop.f32.mrf.mxu0
        %v1391 = vadd.f32 %v1350, %v1390
        %v1392 = vpop.f32.mrf.mxu0
        %v1393 = vpop.f32.mrf.mxu0
        %v1394 = vadd.f32 %v1353, %v1393
        %v1395 = vpop.f32.mrf.mxu0
        %1396 = vdwg.mxu0
        %v1397 = vld [vmem:[%s5] sm:$0x1]
        %v1399 = vlaneseq
        %v1400 = vshrl.u32 %v1399, 7
        %v1401 = vsub.s32 0, %v1400
        %v1402 = vrot.slane %v1397, %v1401
        %v1404 = vmul.f32 %v1391, %v1402
        %v1405 = vmul.f32 %v1394, %v1402
        %v1406 = vld [vmem:[%s6] sm:$0x1]
        %v1408 = vlaneseq
        %v1409 = vshrl.u32 %v1408, 7
        %v1410 = vsub.s32 0, %v1409
        %v1411 = vrot.slane %v1406, %v1410
        %v1413 = vadd.f32 %v1404, %v1411
        %v1414 = vadd.f32 %v1405, %v1411
        %v1415 = vmax.f32 %v1413, 0.0
        %v1416 = vmax.f32 %v1414, 0.0
        %1417 = vst [vmem:[#allocation3] sm:$0xff] 0.0
        %1418 = vst [vmem:[#allocation3 + $0x8] sm:$0xff] 0.0
        %1419 = vst [vmem:[#allocation3 + $0x2] sm:$0xff] %v1415
        %1420 = vst [vmem:[#allocation3 + $0xa] sm:$0xf] %v1416
        %v1421 = vld [vmem:[#allocation3] sm:$0xff]
        %v1422 = vld [vmem:[#allocation3 + $0x8] sm:$0xff]
        %v1425 = vrot.slane %v1421, 1
        %v1426 = vrot.slane %v1422, 1
        %v1427 = vsel %vm429, %v1425, %v1426
        %v1430 = vrot.slane %v1421, 2
        %v1431 = vrot.slane %v1422, 2
        %v1432 = vsel %vm435, %v1430, %v1431
        %v1435 = vrot.slane %v1421, 3
        %v1436 = vrot.slane %v1422, 3
        %v1437 = vsel %vm441, %v1435, %v1436
        %v1440 = vrot.slane %v1421, 4
        %v1441 = vrot.slane %v1422, 4
        %v1442 = vsel %vm447, %v1440, %v1441
        %v1445 = vpack.c.bf16 %v1422, %v1421
        %v1446 = vpack.c.bf16 %v1426, %v1427
        %v1447 = vpack.c.bf16 %v1431, %v1432
        %v1448 = vpack.c.bf16 %v1436, %v1437
        %v1449 = vpack.c.bf16 %v1441, %v1442
        %v1450 = vld [vmem:[#allocation9] sm:$0xf]
        %v1451 = vld [vmem:[#allocation9 + $0x4] sm:$0xf]
        %v1452 = vld [vmem:[#allocation9 + $0x8] sm:$0xf]
        %v1453 = vld [vmem:[#allocation9 + $0xc] sm:$0xf]
        %v1454 = vld [vmem:[#allocation9 + $0x10] sm:$0xf]
        %v1455 = vld [vmem:[#allocation9 + $0x14] sm:$0xf]
        %v1456 = vld [vmem:[#allocation9 + $0x18] sm:$0xf]
        %v1457 = vld [vmem:[#allocation9 + $0x1c] sm:$0xf]
        %v1458 = vld [vmem:[#allocation9 + $0x20] sm:$0xf]
        %v1459 = vld [vmem:[#allocation9 + $0x24] sm:$0xf]
        %v1460 = vld [vmem:[#allocation9 + $0x28] sm:$0xf]
        %v1461 = vld [vmem:[#allocation9 + $0x2c] sm:$0xf]
        %v1462 = vld [vmem:[#allocation9 + $0x30] sm:$0xf]
        %v1463 = vld [vmem:[#allocation9 + $0x34] sm:$0xf]
        %v1464 = vld [vmem:[#allocation9 + $0x38] sm:$0xf]
        %v1465 = vld [vmem:[#allocation9 + $0x3c] sm:$0xf]
        %v1466 = vld [vmem:[#allocation9 + $0x40] sm:$0xf]
        %v1467 = vld [vmem:[#allocation9 + $0x44] sm:$0xf]
        %v1468 = vld [vmem:[#allocation9 + $0x48] sm:$0xf]
        %v1469 = vld [vmem:[#allocation9 + $0x4c] sm:$0xf]
        %v1470 = vld [vmem:[#allocation9 + $0x50] sm:$0xf]
        %v1471 = vld [vmem:[#allocation9 + $0x54] sm:$0xf]
        %v1472 = vld [vmem:[#allocation9 + $0x58] sm:$0xf]
        %v1473 = vld [vmem:[#allocation9 + $0x5c] sm:$0xf]
        %v1474 = vld [vmem:[#allocation9 + $0x60] sm:$0xf]
        %v1475 = vld [vmem:[#allocation9 + $0x64] sm:$0xf]
        %v1476 = vld [vmem:[#allocation9 + $0x68] sm:$0xf]
        %v1477 = vld [vmem:[#allocation9 + $0x6c] sm:$0xf]
        %v1478 = vld [vmem:[#allocation9 + $0x70] sm:$0xf]
        %v1479 = vld [vmem:[#allocation9 + $0x74] sm:$0xf]
        %v1480 = vld [vmem:[#allocation9 + $0x78] sm:$0xf]
        %v1481 = vld [vmem:[#allocation9 + $0x7c] sm:$0xf]
        %v1482 = vld [vmem:[#allocation9 + $0x80] sm:$0xf]
        %v1483 = vld [vmem:[#allocation9 + $0x84] sm:$0xf]
        %v1484 = vld [vmem:[#allocation9 + $0x88] sm:$0xf]
        %v1485 = vld [vmem:[#allocation9 + $0x8c] sm:$0xf]
        %v1486 = vld [vmem:[#allocation9 + $0x90] sm:$0xf]
        %v1487 = vld [vmem:[#allocation9 + $0x94] sm:$0xf]
        %v1488 = vld [vmem:[#allocation9 + $0x98] sm:$0xf]
        %v1489 = vld [vmem:[#allocation9 + $0x9c] sm:$0xf]
        %v1490 = vld [vmem:[#allocation9 + $0xa0] sm:$0xf]
        %v1491 = vld [vmem:[#allocation9 + $0xa4] sm:$0xf]
        %v1492 = vld [vmem:[#allocation9 + $0xa8] sm:$0xf]
        %v1493 = vld [vmem:[#allocation9 + $0xac] sm:$0xf]
        %v1494 = vld [vmem:[#allocation9 + $0xb0] sm:$0xf]
        %v1495 = vld [vmem:[#allocation9 + $0xb4] sm:$0xf]
        %v1496 = vld [vmem:[#allocation9 + $0xb8] sm:$0xf]
        %v1497 = vld [vmem:[#allocation9 + $0xbc] sm:$0xf]
        %v1498 = vld [vmem:[#allocation9 + $0xc0] sm:$0xf]
        %v1499 = vld [vmem:[#allocation9 + $0xc4] sm:$0xf]
        %v1500 = vld [vmem:[#allocation9 + $0xc8] sm:$0xf]
        %v1501 = vld [vmem:[#allocation9 + $0xcc] sm:$0xf]
        %v1502 = vld [vmem:[#allocation9 + $0xd0] sm:$0xf]
        %v1503 = vld [vmem:[#allocation9 + $0xd4] sm:$0xf]
        %v1504 = vld [vmem:[#allocation9 + $0xd8] sm:$0xf]
        %v1505 = vld [vmem:[#allocation9 + $0xdc] sm:$0xf]
        %v1506 = vld [vmem:[#allocation9 + $0xe0] sm:$0xf]
        %v1507 = vld [vmem:[#allocation9 + $0xe4] sm:$0xf]
        %v1508 = vld [vmem:[#allocation9 + $0xe8] sm:$0xf]
        %v1509 = vld [vmem:[#allocation9 + $0xec] sm:$0xf]
        %v1510 = vld [vmem:[#allocation9 + $0xf0] sm:$0xf]
        %v1511 = vld [vmem:[#allocation9 + $0xf4] sm:$0xf]
        %v1512 = vld [vmem:[#allocation9 + $0xf8] sm:$0xf]
        %v1513 = vld [vmem:[#allocation9 + $0xfc] sm:$0xf]
        %v1514 = vld [vmem:[#allocation9 + $0x100] sm:$0xf]
        %v1515 = vld [vmem:[#allocation9 + $0x104] sm:$0xf]
        %v1516 = vld [vmem:[#allocation9 + $0x108] sm:$0xf]
        %v1517 = vld [vmem:[#allocation9 + $0x10c] sm:$0xf]
        %v1518 = vld [vmem:[#allocation9 + $0x110] sm:$0xf]
        %v1519 = vld [vmem:[#allocation9 + $0x114] sm:$0xf]
        %v1520 = vld [vmem:[#allocation9 + $0x118] sm:$0xf]
        %v1521 = vld [vmem:[#allocation9 + $0x11c] sm:$0xf]
        %v1522 = vld [vmem:[#allocation9 + $0x120] sm:$0xf]
        %v1523 = vld [vmem:[#allocation9 + $0x124] sm:$0xf]
        %v1524 = vld [vmem:[#allocation9 + $0x128] sm:$0xf]
        %v1525 = vld [vmem:[#allocation9 + $0x12c] sm:$0xf]
        %v1526 = vld [vmem:[#allocation9 + $0x130] sm:$0xf]
        %v1527 = vld [vmem:[#allocation9 + $0x134] sm:$0xf]
        %v1528 = vld [vmem:[#allocation9 + $0x138] sm:$0xf]
        %v1529 = vld [vmem:[#allocation9 + $0x13c] sm:$0xf]
        %v1610 = vunpack.c.l.b16 %v1450
        %v1611 = vunpack.c.l.b16 %v1451
        %v1612 = vunpack.c.l.b16 %v1452
        %v1613 = vunpack.c.l.b16 %v1453
        %v1614 = vunpack.c.l.b16 %v1454
        %v1615 = vunpack.c.l.b16 %v1455
        %v1616 = vunpack.c.l.b16 %v1456
        %v1617 = vunpack.c.l.b16 %v1457
        %v1618 = vunpack.c.l.b16 %v1458
        %v1619 = vunpack.c.l.b16 %v1459
        %v1620 = vunpack.c.l.b16 %v1460
        %v1621 = vunpack.c.l.b16 %v1461
        %v1622 = vunpack.c.l.b16 %v1462
        %v1623 = vunpack.c.l.b16 %v1463
        %v1624 = vunpack.c.l.b16 %v1464
        %v1625 = vunpack.c.l.b16 %v1465
        %v1626 = vunpack.c.l.b16 %v1466
        %v1627 = vunpack.c.l.b16 %v1467
        %v1628 = vunpack.c.l.b16 %v1468
        %v1629 = vunpack.c.l.b16 %v1469
        %v1630 = vunpack.c.l.b16 %v1470
        %v1631 = vunpack.c.l.b16 %v1471
        %v1632 = vunpack.c.l.b16 %v1472
        %v1633 = vunpack.c.l.b16 %v1473
        %v1634 = vunpack.c.l.b16 %v1474
        %v1635 = vunpack.c.l.b16 %v1475
        %v1636 = vunpack.c.l.b16 %v1476
        %v1637 = vunpack.c.l.b16 %v1477
        %v1638 = vunpack.c.l.b16 %v1478
        %v1639 = vunpack.c.l.b16 %v1479
        %v1640 = vunpack.c.l.b16 %v1480
        %v1641 = vunpack.c.l.b16 %v1481
        %v1642 = vunpack.c.l.b16 %v1482
        %v1643 = vunpack.c.l.b16 %v1483
        %v1644 = vunpack.c.l.b16 %v1484
        %v1645 = vunpack.c.l.b16 %v1485
        %v1646 = vunpack.c.l.b16 %v1486
        %v1647 = vunpack.c.l.b16 %v1487
        %v1648 = vunpack.c.l.b16 %v1488
        %v1649 = vunpack.c.l.b16 %v1489
        %v1650 = vunpack.c.l.b16 %v1490
        %v1651 = vunpack.c.l.b16 %v1491
        %v1652 = vunpack.c.l.b16 %v1492
        %v1653 = vunpack.c.l.b16 %v1493
        %v1654 = vunpack.c.l.b16 %v1494
        %v1655 = vunpack.c.l.b16 %v1495
        %v1656 = vunpack.c.l.b16 %v1496
        %v1657 = vunpack.c.l.b16 %v1497
        %v1658 = vunpack.c.l.b16 %v1498
        %v1659 = vunpack.c.l.b16 %v1499
        %v1660 = vunpack.c.l.b16 %v1500
        %v1661 = vunpack.c.l.b16 %v1501
        %v1662 = vunpack.c.l.b16 %v1502
        %v1663 = vunpack.c.l.b16 %v1503
        %v1664 = vunpack.c.l.b16 %v1504
        %v1665 = vunpack.c.l.b16 %v1505
        %v1666 = vunpack.c.l.b16 %v1506
        %v1667 = vunpack.c.l.b16 %v1507
        %v1668 = vunpack.c.l.b16 %v1508
        %v1669 = vunpack.c.l.b16 %v1509
        %v1670 = vunpack.c.l.b16 %v1510
        %v1671 = vunpack.c.l.b16 %v1511
        %v1672 = vunpack.c.l.b16 %v1512
        %v1673 = vunpack.c.l.b16 %v1513
        %v1674 = vunpack.c.l.b16 %v1514
        %v1675 = vunpack.c.l.b16 %v1515
        %v1676 = vunpack.c.l.b16 %v1516
        %v1677 = vunpack.c.l.b16 %v1517
        %v1678 = vunpack.c.l.b16 %v1518
        %v1679 = vunpack.c.l.b16 %v1519
        %v1680 = vunpack.c.l.b16 %v1520
        %v1681 = vunpack.c.l.b16 %v1521
        %v1682 = vunpack.c.l.b16 %v1522
        %v1683 = vunpack.c.l.b16 %v1523
        %v1684 = vunpack.c.l.b16 %v1524
        %v1685 = vunpack.c.l.b16 %v1525
        %v1686 = vunpack.c.l.b16 %v1526
        %v1687 = vunpack.c.l.b16 %v1527
        %v1688 = vunpack.c.l.b16 %v1528
        %v1689 = vunpack.c.l.b16 %v1529
        %v1690 = vpack.c.b16 %v1611, %v1610
        %v1691 = vpack.c.b16 %v1613, %v1612
        %v1692 = vpack.c.b16 %v1615, %v1614
        %v1693 = vpack.c.b16 %v1617, %v1616
        %v1694 = vpack.c.b16 %v1619, %v1618
        %v1695 = vpack.c.b16 %v1621, %v1620
        %v1696 = vpack.c.b16 %v1623, %v1622
        %v1697 = vpack.c.b16 %v1625, %v1624
        %v1698 = vpack.c.b16 %v1627, %v1626
        %v1699 = vpack.c.b16 %v1629, %v1628
        %v1700 = vpack.c.b16 %v1631, %v1630
        %v1701 = vpack.c.b16 %v1633, %v1632
        %v1702 = vpack.c.b16 %v1635, %v1634
        %v1703 = vpack.c.b16 %v1637, %v1636
        %v1704 = vpack.c.b16 %v1639, %v1638
        %v1705 = vpack.c.b16 %v1641, %v1640
        %v1706 = vpack.c.b16 %v1643, %v1642
        %v1707 = vpack.c.b16 %v1645, %v1644
        %v1708 = vpack.c.b16 %v1647, %v1646
        %v1709 = vpack.c.b16 %v1649, %v1648
        %v1710 = vpack.c.b16 %v1651, %v1650
        %v1711 = vpack.c.b16 %v1653, %v1652
        %v1712 = vpack.c.b16 %v1655, %v1654
        %v1713 = vpack.c.b16 %v1657, %v1656
        %v1714 = vpack.c.b16 %v1659, %v1658
        %v1715 = vpack.c.b16 %v1661, %v1660
        %v1716 = vpack.c.b16 %v1663, %v1662
        %v1717 = vpack.c.b16 %v1665, %v1664
        %v1718 = vpack.c.b16 %v1667, %v1666
        %v1719 = vpack.c.b16 %v1669, %v1668
        %v1720 = vpack.c.b16 %v1671, %v1670
        %v1721 = vpack.c.b16 %v1673, %v1672
        %v1722 = vpack.c.b16 %v1675, %v1674
        %v1723 = vpack.c.b16 %v1677, %v1676
        %v1724 = vpack.c.b16 %v1679, %v1678
        %v1725 = vpack.c.b16 %v1681, %v1680
        %v1726 = vpack.c.b16 %v1683, %v1682
        %v1727 = vpack.c.b16 %v1685, %v1684
        %v1728 = vpack.c.b16 %v1687, %v1686
        %v1729 = vpack.c.b16 %v1689, %v1688
        %1770 = vmatprep.subr.bf16.mxu0 0
        %1771 = vmatpush1.bf16.msra.mxu0 %v1697
        %1772 = vmatprep.subr.bf16.mxu0 0
        %1773 = vmatpush1.bf16.msra.mxu0 %v1696
        %1774 = vmatprep.subr.bf16.mxu0 0
        %1775 = vmatpush1.bf16.msra.mxu0 %v1695
        %1776 = vmatprep.subr.bf16.mxu0 0
        %1777 = vmatpush1.bf16.msra.mxu0 %v1694
        %1778 = vmatprep.subr.bf16.mxu0 0
        %1779 = vmatpush1.bf16.msra.mxu0 %v1693
        %1780 = vmatprep.subr.bf16.mxu0 0
        %1781 = vmatpush1.bf16.msra.mxu0 %v1692
        %1782 = vmatprep.subr.bf16.mxu0 0
        %1783 = vmatpush1.bf16.msra.mxu0 %v1691
        %1784 = vmatprep.subr.bf16.mxu0 0
        %1785 = vmatpush1.bf16.msra.mxu0 %v1690
        %1786 = vmatprep.subr.bf16.mxu0 0
        %1787 = vmatpush2.bf16.msra.mxu0 %v1705
        %1788 = vmatprep.subr.bf16.mxu0 0
        %1789 = vmatpush2.bf16.msra.mxu0 %v1704
        %1790 = vmatprep.subr.bf16.mxu0 0
        %1791 = vmatpush2.bf16.msra.mxu0 %v1703
        %1792 = vmatprep.subr.bf16.mxu0 0
        %1793 = vmatpush2.bf16.msra.mxu0 %v1702
        %1794 = vmatprep.subr.bf16.mxu0 0
        %1795 = vmatpush2.bf16.msra.mxu0 %v1701
        %1796 = vmatprep.subr.bf16.mxu0 0
        %1797 = vmatpush2.bf16.msra.mxu0 %v1700
        %1798 = vmatprep.subr.bf16.mxu0 0
        %1799 = vmatpush2.bf16.msra.mxu0 %v1699
        %1800 = vmatprep.subr.bf16.mxu0 0
        %1801 = vmatpush2.bf16.msra.mxu0 %v1698
        %1802 = vmatprep.mubr.bf16.mxu0 %v1446
        %1803 = vmatmul.mubr.bf16.gmra.mxu0 %v1445
        %v1804 = vpop.f32.mrf.mxu0
        %v1805 = vadd.f32 0.0, %v1804
        %v1806 = vpop.f32.mrf.mxu0
        %v1807 = vpop.f32.mrf.mxu0
        %v1808 = vadd.f32 0.0, %v1807
        %v1809 = vpop.f32.mrf.mxu0
        %1810 = vdwg.mxu0
        %1811 = vmatprep.subr.bf16.mxu0 0
        %1812 = vmatpush1.bf16.msra.mxu0 %v1713
        %1813 = vmatprep.subr.bf16.mxu0 0
        %1814 = vmatpush1.bf16.msra.mxu0 %v1712
        %1815 = vmatprep.subr.bf16.mxu0 0
        %1816 = vmatpush1.bf16.msra.mxu0 %v1711
        %1817 = vmatprep.subr.bf16.mxu0 0
        %1818 = vmatpush1.bf16.msra.mxu0 %v1710
        %1819 = vmatprep.subr.bf16.mxu0 0
        %1820 = vmatpush1.bf16.msra.mxu0 %v1709
        %1821 = vmatprep.subr.bf16.mxu0 0
        %1822 = vmatpush1.bf16.msra.mxu0 %v1708
        %1823 = vmatprep.subr.bf16.mxu0 0
        %1824 = vmatpush1.bf16.msra.mxu0 %v1707
        %1825 = vmatprep.subr.bf16.mxu0 0
        %1826 = vmatpush1.bf16.msra.mxu0 %v1706
        %1827 = vmatprep.subr.bf16.mxu0 0
        %1828 = vmatpush2.bf16.msra.mxu0 %v1721
        %1829 = vmatprep.subr.bf16.mxu0 0
        %1830 = vmatpush2.bf16.msra.mxu0 %v1720
        %1831 = vmatprep.subr.bf16.mxu0 0
        %1832 = vmatpush2.bf16.msra.mxu0 %v1719
        %1833 = vmatprep.subr.bf16.mxu0 0
        %1834 = vmatpush2.bf16.msra.mxu0 %v1718
        %1835 = vmatprep.subr.bf16.mxu0 0
        %1836 = vmatpush2.bf16.msra.mxu0 %v1717
        %1837 = vmatprep.subr.bf16.mxu0 0
        %1838 = vmatpush2.bf16.msra.mxu0 %v1716
        %1839 = vmatprep.subr.bf16.mxu0 0
        %1840 = vmatpush2.bf16.msra.mxu0 %v1715
        %1841 = vmatprep.subr.bf16.mxu0 0
        %1842 = vmatpush2.bf16.msra.mxu0 %v1714
        %1843 = vmatprep.mubr.bf16.mxu0 %v1448
        %1844 = vmatmul.mubr.bf16.gmra.mxu0 %v1447
        %v1845 = vpop.f32.mrf.mxu0
        %v1846 = vadd.f32 %v1805, %v1845
        %v1847 = vpop.f32.mrf.mxu0
        %v1848 = vpop.f32.mrf.mxu0
        %v1849 = vadd.f32 %v1808, %v1848
        %v1850 = vpop.f32.mrf.mxu0
        %1851 = vdwg.mxu0
        %1852 = vmatprep.subr.bf16.mxu0 0
        %1853 = vmatpush1.bf16.msra.mxu0 %v1729
        %1854 = vmatprep.subr.bf16.mxu0 0
        %1855 = vmatpush1.bf16.msra.mxu0 %v1728
        %1856 = vmatprep.subr.bf16.mxu0 0
        %1857 = vmatpush1.bf16.msra.mxu0 %v1727
        %1858 = vmatprep.subr.bf16.mxu0 0
        %1859 = vmatpush1.bf16.msra.mxu0 %v1726
        %1860 = vmatprep.subr.bf16.mxu0 0
        %1861 = vmatpush1.bf16.msra.mxu0 %v1725
        %1862 = vmatprep.subr.bf16.mxu0 0
        %1863 = vmatpush1.bf16.msra.mxu0 %v1724
        %1864 = vmatprep.subr.bf16.mxu0 0
        %1865 = vmatpush1.bf16.msra.mxu0 %v1723
        %1866 = vmatprep.subr.bf16.mxu0 0
        %1867 = vmatpush1.bf16.msra.mxu0 %v1722
        %1868 = vmatprep.subr.bf16.mxu0 0
        %1869 = vmatpush2.bf16.msra.mxu0 0
        %1870 = vmatprep.subr.bf16.mxu0 0
        %1871 = vmatpush2.bf16.msra.mxu0 0
        %1872 = vmatprep.subr.bf16.mxu0 0
        %1873 = vmatpush2.bf16.msra.mxu0 0
        %1874 = vmatprep.subr.bf16.mxu0 0
        %1875 = vmatpush2.bf16.msra.mxu0 0
        %1876 = vmatprep.subr.bf16.mxu0 0
        %1877 = vmatpush2.bf16.msra.mxu0 0
        %1878 = vmatprep.subr.bf16.mxu0 0
        %1879 = vmatpush2.bf16.msra.mxu0 0
        %1880 = vmatprep.subr.bf16.mxu0 0
        %1881 = vmatpush2.bf16.msra.mxu0 0
        %1882 = vmatprep.subr.bf16.mxu0 0
        %1883 = vmatpush2.bf16.msra.mxu0 0
        %1884 = vmatprep.mubr.bf16.mxu0 0
        %1885 = vmatmul.mubr.bf16.gmra.mxu0 %v1449
        %v1886 = vpop.f32.mrf.mxu0
        %v1887 = vadd.f32 %v1846, %v1886
        %v1888 = vpop.f32.mrf.mxu0
        %v1889 = vpop.f32.mrf.mxu0
        %v1890 = vadd.f32 %v1849, %v1889
        %v1891 = vpop.f32.mrf.mxu0
        %1892 = vdwg.mxu0
        %v1893 = vld [vmem:[%s8] sm:$0x1]
        %v1895 = vlaneseq
        %v1896 = vshrl.u32 %v1895, 7
        %v1897 = vsub.s32 0, %v1896
        %v1898 = vrot.slane %v1893, %v1897
        %v1900 = vmul.f32 %v1887, %v1898
        %v1901 = vmul.f32 %v1890, %v1898
        %v1902 = vld [vmem:[%s9] sm:$0x1]
        %v1904 = vlaneseq
        %v1905 = vshrl.u32 %v1904, 7
        %v1906 = vsub.s32 0, %v1905
        %v1907 = vrot.slane %v1902, %v1906
        %v1909 = vadd.f32 %v1900, %v1907
        %v1910 = vadd.f32 %v1901, %v1907
        %v1911 = vmax.f32 %v1909, 0.0
        %v1912 = vmax.f32 %v1910, 0.0
        %1913 = vst [vmem:[%s423] sm:$0xff] %v1911
        %1914 = vst [vmem:[%s423 + $0x8] sm:$0xf] %v1912
        %p1915 = scmp.lt.s32.totalorder %s26, 1
        %s1916 = scalar_select %p1915, %s26, 1
        %s1917 = smul.addr %s1916, 2
        %s1918 = smul.addr %s1917, 8
        %s1919 = scalar_lea.vmem %s10, %s1918
        // Predicated region
        $region77: #{tpu_custom_call.1} parent=59 // pred_check
          %p1920 = pneg %p259
        $region78: #{tpu_custom_call.1} parent=59 // pred_check_branch
          %1922 = sbr.rel (%p1920) target = $region80
        $region79: #{tpu_custom_call.1} parent=59 // pred_region
          _
        $region80: #{tpu_custom_call.1} parent=59 // pred_fallthru
          _
      $region60: #{tpu_custom_call.1} parent=5 // pred_fallthru
        _
      %p1923 = scmp.le.s32.totalorder 2, %s21
      // Predicated region
      $region81: #{tpu_custom_call.1} parent=5 // pred_check
        %p1924 = pneg %p1923
      $region82: #{tpu_custom_call.1} parent=5 // pred_check_branch
        %1926 = sbr.rel (%p1924) target = $region84
      $region83: #{tpu_custom_call.1} parent=5 // pred_region
        %s1927 = ssub.s32 %s21, 2
        // Predicated region
        $region85: #{tpu_custom_call.1} parent=83 // pred_check
          %p1928 = pneg %p265
        $region86: #{tpu_custom_call.1} parent=83 // pred_check_branch
          %1930 = sbr.rel (%p1928) target = $region88
        $region87: #{tpu_custom_call.1} parent=83 // pred_region
          %p1931 = scmp.lt.s32.totalorder %s27, 1
          %s1932 = scalar_select %p1931, %s27, 1
          %s1933 = smul.addr %s1932, 2
          %s1934 = smul.addr %s1933, 8
          %s1935 = scalar_lea.vmem %s10, %s1934
        $region88: #{tpu_custom_call.1} parent=83 // pred_fallthru
          _
      $region84: #{tpu_custom_call.1} parent=5 // pred_fallthru
        _
    $region6: #{tpu_custom_call.1} parent=1 // loop_footer
      %s25 = sadd.s32 1, %s21
    $region7: #{tpu_custom_call.1} parent=1 // loop_footer_branch
      %20 = sbr.rel target = $region3
    $region8: #{tpu_custom_call.1} parent=1 // loop_exit
      _
    %1936 = vsyncpa [#allocation5], 1
    %s1937 = scalar_lea.sflag [#allocation5], 1
    %1938 = vsyncpa %s1937, 1
    %1939 = vsyncpa [#allocation7], 1
    %1940 = vsyncpa [#allocation10], 1

</llo_original>
